<compile_context>
chip_gen: v5e
topology: v5e:2x2
jax: 0.10.0
libtpu: 0.0.40
codegen_flags: <defaults>
</compile_context>

<pallas_src>
import jax
import jax.numpy as jnp
import numpy as np
from jax.experimental import pallas as pl
from jax.experimental.pallas import tpu as pltpu


# --------------------------------- kernel ----------------------------------

def _make_kernel(num_layers: int, T: int, B: int, E: int, H: int):
    """Per-stream decoder kernel: full T-step recurrence in one invocation."""

    def kernel(*refs):
        n_rest = 2 * (num_layers - 1)
        feats_ref = refs[0]                 # (T, B, E)
        wprev_ref = refs[1]                 # (E, 3H)   (prev-embed half of W_ih)
        wfeat_ref = refs[2]                 # (E, 3H)   (feature half of W_ih)
        b0_ref = refs[3]                    # (1, 3H)
        rest_refs = refs[4:4 + n_rest]      # [(H,3H), (1,3H)] * (L-1)
        wlin_ref = refs[4 + n_rest]         # (H, E)
        blin_ref = refs[5 + n_rest]         # (1, E)
        out_ref = refs[6 + n_rest]          # (B, T*E)  lane-dense output slab

        # Hoist weight loads and bias broadcasts out of the time loop
        # (JAX does not CSE broadcast_in_dim inside the unrolled loop).
        w_prev = wprev_ref[...]
        w_feat = wfeat_ref[...]
        b0 = jnp.broadcast_to(b0_ref[...], (B, 3 * H))
        rest = []
        for l in range(num_layers - 1):
            rest.append((rest_refs[2 * l][...],
                         jnp.broadcast_to(rest_refs[2 * l + 1][...], (B, 3 * H))))
        w_lin = wlin_ref[...]
        b_lin = jnp.broadcast_to(blin_ref[...], (B, E))

        def cell(gates):
            # pruned gate order: (i, g, o); c_prev == 0 -> c = i*g
            i_g = jax.nn.sigmoid(gates[:, 0:H])
            g_g = jnp.tanh(gates[:, H:2 * H])
            o_g = jax.nn.sigmoid(gates[:, 2 * H:3 * H])
            return o_g * jnp.tanh(i_g * g_g)

        # prev_embed starts at zeros (matches torch.zeros([B, 1, E]))
        prev = jnp.zeros((B, E), jnp.float32)

        # T is small and static -> fully unrolled serial recurrence in-register.
        for t in range(T):
            feat = feats_ref[t]                                    # (B, E)
            gates0 = (jnp.dot(prev, w_prev, preferred_element_type=jnp.float32)
                      + jnp.dot(feat, w_feat, preferred_element_type=jnp.float32)
                      + b0)
            h = cell(gates0)
            for (w_l, b_l) in rest:
                h = cell(jnp.dot(h, w_l, preferred_element_type=jnp.float32) + b_l)
            y = jnp.dot(h, w_lin, preferred_element_type=jnp.float32) + b_lin
            out_ref[:, t * E:(t + 1) * E] = y                      # static slice
            prev = y

    return kernel


# --------------------------------- wrapper ---------------------------------

def _prune_split_lstm(w0, b0, rest, E, H):
    """Drop dead forget-gate columns (i,f,g,o -> i,g,o) and split W_ih."""
    def prune(m):
        return jnp.concatenate(
            [m[..., 0:H], m[..., 2 * H:3 * H], m[..., 3 * H:4 * H]], axis=-1)

    w0p = prune(w0)                  # (2E, 3H)
    w_prev, w_feat = w0p[:E], w0p[E:]
    b0p = prune(b0)                  # (1, 3H)
    rest_p = []
    for l in range(len(rest) // 2):
        rest_p.append(prune(rest[2 * l]))        # (H, 3H)
        rest_p.append(prune(rest[2 * l + 1]))    # (1, 3H)
    return w_prev, w_feat, b0p, rest_p


def decoder_rnn_forward(upper_features, lower_features, params):
    """Fused two-stream decoder. Returns (upper_out, lower_out), each (T*B, E)."""
    B, T, E = upper_features.shape
    H = params["lin_w"].shape[0]
    L = 1 + len(params["upp_rest"]) // 2

    u_wp, u_wf, u_b0, u_rest = _prune_split_lstm(
        params["upp_w0"], params["upp_b0"], params["upp_rest"], E, H)
    l_wp, l_wf, l_b0, l_rest = _prune_split_lstm(
        params["low_w0"], params["low_b0"], params["low_rest"], E, H)

    # Stack the two streams on a leading axis -> one pallas_call, grid=(2,).
    feats = jnp.stack([jnp.transpose(upper_features, (1, 0, 2)),
                       jnp.transpose(lower_features, (1, 0, 2))])   # (2, T, B, E)
    w_prev = jnp.stack([u_wp, l_wp])                                # (2, E, 3H)
    w_feat = jnp.stack([u_wf, l_wf])                                # (2, E, 3H)
    b0 = jnp.stack([u_b0, l_b0])                                    # (2, 1, 3H)
    rest_stk = [jnp.stack([u, l]) for u, l in zip(u_rest, l_rest)]
    w_lin, b_lin = params["lin_w"], params["lin_b"]                 # shared Linear

    in_specs = [
        pl.BlockSpec((None, T, B, E), lambda s: (s, 0, 0, 0)),
        pl.BlockSpec((None, E, 3 * H), lambda s: (s, 0, 0)),
        pl.BlockSpec((None, E, 3 * H), lambda s: (s, 0, 0)),
        pl.BlockSpec((None, 1, 3 * H), lambda s: (s, 0, 0)),
    ]
    args = [feats, w_prev, w_feat, b0]
    for p in rest_stk:
        in_specs.append(pl.BlockSpec((None,) + p.shape[1:], lambda s: (s, 0, 0)))
        args.append(p)
    in_specs.append(pl.BlockSpec(w_lin.shape, lambda s: (0, 0)))
    in_specs.append(pl.BlockSpec(b_lin.shape, lambda s: (0, 0)))
    args += [w_lin, b_lin]

    out = pl.pallas_call(
        _make_kernel(L, T, B, E, H),
        out_shape=jax.ShapeDtypeStruct((2, B, T * E), jnp.float32),
        grid_spec=pltpu.PrefetchScalarGridSpec(
            num_scalar_prefetch=0,
            grid=(2,),                      # stream axis only; time is in-kernel
            in_specs=in_specs,
            out_specs=pl.BlockSpec((None, B, T * E), lambda s: (s, 0, 0)),
        ),
        compiler_params=pltpu.CompilerParams(
            dimension_semantics=("parallel",)),   # streams independent (v7x: 2 TCs)
    )(*args)

    # (B, T*E) -> torch layout: cat over steps along dim 0 -> (T*B, E)
    def to_torch_layout(o):
        return jnp.transpose(o.reshape(B, T, E), (1, 0, 2)).reshape(T * B, E)

    return to_torch_layout(out[0]), to_torch_layout(out[1])


# ----------------------------- pure-JAX reference -----------------------------

def _ref_stream(features, w0, b0, rest, w_lin, b_lin, E, H):
    B, T, _ = features.shape
    prev = jnp.zeros((B, E), jnp.float32)
    outs = []
    for t in range(T):
        x = jnp.concatenate([prev, features[:, t, :]], axis=-1)
        layers = [(w0, b0)] + [(rest[2 * l], rest[2 * l + 1])
                               for l in range(len(rest) // 2)]
        h = x
        for (w, b) in layers:
            gates = h @ w + b
            i = jax.nn.sigmoid(gates[:, :H])
            g = jnp.tanh(gates[:, 2 * H:3 * H])
            o = jax.nn.sigmoid(gates[:, 3 * H:])
            h = o * jnp.tanh(i * g)
        y = h @ w_lin + b_lin
        prev = y
        outs.append(y)
    return jnp.concatenate(outs, axis=0)


# ------------------------------------ main ------------------------------------

if __name__ == "__main__":
    B, T = 2, 8          # batch, sequence length
    E, H = 32, 32        # embed_size, hidden_size
    L = 2                # num_layers

    key = jax.random.PRNGKey(0)
    ks = iter(jax.random.split(key, 32))
    scale = 1.0 / np.sqrt(H)

    def u(shape):
        return jax.random.uniform(next(ks), shape, jnp.float32, -scale, scale)

    # LSTM params: W_ih transposed to (in_dim, 4H); biases combined (b_ih + b_hh).
    # (W_hh is mathematically unused: states=None each step -> h_prev = c_prev = 0.)
    def make_lstm():
        w0 = u((2 * E, 4 * H))
        b0 = u((1, 4 * H)) + u((1, 4 * H))
        rest = []
        for _ in range(L - 1):
            rest.append(u((H, 4 * H)))
            rest.append(u((1, 4 * H)) + u((1, 4 * H)))
        return w0, b0, rest

    upp_w0, upp_b0, upp_rest = make_lstm()
    low_w0, low_b0, low_rest = make_lstm()
    lin_w = u((H, E))            # Linear weight, transposed for x @ W
    lin_b = u((1, E))

    params = dict(upp_w0=upp_w0, upp_b0=upp_b0, upp_rest=upp_rest,
                  low_w0=low_w0, low_b0=low_b0, low_rest=low_rest,
                  lin_w=lin_w, lin_b=lin_b)

    upper_features = jax.random.normal(next(ks), (B, T, E), jnp.float32)
    lower_features = jax.random.normal(next(ks), (B, T, E), jnp.float32)

    fwd = jax.jit(decoder_rnn_forward)
    up_out, low_out = fwd(upper_features, lower_features, params)
    jax.block_until_ready((up_out, low_out))

    # correctness check against a pure-JAX reference (full 4H weights,
    # validating the forget-gate pruning + split-matmul transformation too)
    up_ref = _ref_stream(upper_features, upp_w0, upp_b0, upp_rest,
                         lin_w, lin_b, E, H)
    low_ref = _ref_stream(lower_features, low_w0, low_b0, low_rest,
                          lin_w, lin_b, E, H)
    assert up_out.shape == (T * B, E) and low_out.shape == (T * B, E)
    np.testing.assert_allclose(np.asarray(up_out), np.asarray(up_ref),
                               rtol=1e-5, atol=1e-5)
    np.testing.assert_allclose(np.asarray(low_out), np.asarray(low_ref),
                               rtol=1e-5, atol=1e-5)

    print("KERNEL_OK")
</pallas_src>

<mosaic_0001>
module attributes {stable_mosaic.version = 11 : i64} {
  func.func @kernel(%arg0: i32, %arg1: memref<1x8x2x32xf32, #tpu.memory_space<vmem>>, %arg2: memref<1x32x96xf32, #tpu.memory_space<vmem>>, %arg3: memref<1x32x96xf32, #tpu.memory_space<vmem>>, %arg4: memref<1x1x96xf32, #tpu.memory_space<vmem>>, %arg5: memref<1x32x96xf32, #tpu.memory_space<vmem>>, %arg6: memref<1x1x96xf32, #tpu.memory_space<vmem>>, %arg7: memref<32x32xf32, #tpu.memory_space<vmem>>, %arg8: memref<1x32xf32, #tpu.memory_space<vmem>>, %arg9: memref<1x2x256xf32, #tpu.memory_space<vmem>>) attributes {dimension_semantics = [#tpu.dimension_semantics<parallel>], iteration_bounds = array<i64: 2>, scalar_prefetch = 0 : i64, scratch_operands = 0 : i64, tpu.core_type = #tpu.core_type<tc>, window_params = [{transform_indices = @transform_0, window_bounds = array<i64: 1, 8, 2, 32>}, {transform_indices = @transform_1, window_bounds = array<i64: 1, 32, 96>}, {transform_indices = @transform_2, window_bounds = array<i64: 1, 32, 96>}, {transform_indices = @transform_3, window_bounds = array<i64: 1, 1, 96>}, {transform_indices = @transform_4, window_bounds = array<i64: 1, 32, 96>}, {transform_indices = @transform_5, window_bounds = array<i64: 1, 1, 96>}, {pipeline_mode = #tpu.pipeline_mode<synchronous>, transform_indices = @transform_6, window_bounds = array<i64: 32, 32>}, {pipeline_mode = #tpu.pipeline_mode<synchronous>, transform_indices = @transform_7, window_bounds = array<i64: 1, 32>}, {transform_indices = @transform_8, window_bounds = array<i64: 1, 2, 256>}]} {
    %c0 = arith.constant 0 : index
    %c0_0 = arith.constant 0 : index
    %c0_1 = arith.constant 0 : index
    %0 = vector.load %arg2[%c0, %c0_0, %c0_1] : memref<1x32x96xf32, #tpu.memory_space<vmem>>, vector<1x32x96xf32>
    %1 = vector.shape_cast %0 : vector<1x32x96xf32> to vector<32x96xf32>
    %c0_2 = arith.constant 0 : index
    %c0_3 = arith.constant 0 : index
    %c0_4 = arith.constant 0 : index
    %2 = vector.load %arg3[%c0_2, %c0_3, %c0_4] : memref<1x32x96xf32, #tpu.memory_space<vmem>>, vector<1x32x96xf32>
    %3 = vector.shape_cast %2 : vector<1x32x96xf32> to vector<32x96xf32>
    %c0_5 = arith.constant 0 : index
    %c0_6 = arith.constant 0 : index
    %c0_7 = arith.constant 0 : index
    %4 = vector.load %arg4[%c0_5, %c0_6, %c0_7] : memref<1x1x96xf32, #tpu.memory_space<vmem>>, vector<1x1x96xf32>
    %5 = vector.shape_cast %4 : vector<1x1x96xf32> to vector<1x96xf32>
    %6 = vector.shape_cast %5 : vector<1x96xf32> to vector<1x96xf32>
    %7 = vector.broadcast %6 : vector<1x96xf32> to vector<2x96xf32>
    %c0_8 = arith.constant 0 : index
    %c0_9 = arith.constant 0 : index
    %c0_10 = arith.constant 0 : index
    %8 = vector.load %arg5[%c0_8, %c0_9, %c0_10] : memref<1x32x96xf32, #tpu.memory_space<vmem>>, vector<1x32x96xf32>
    %9 = vector.shape_cast %8 : vector<1x32x96xf32> to vector<32x96xf32>
    %c0_11 = arith.constant 0 : index
    %c0_12 = arith.constant 0 : index
    %c0_13 = arith.constant 0 : index
    %10 = vector.load %arg6[%c0_11, %c0_12, %c0_13] : memref<1x1x96xf32, #tpu.memory_space<vmem>>, vector<1x1x96xf32>
    %11 = vector.shape_cast %10 : vector<1x1x96xf32> to vector<1x96xf32>
    %12 = vector.shape_cast %11 : vector<1x96xf32> to vector<1x96xf32>
    %13 = vector.broadcast %12 : vector<1x96xf32> to vector<2x96xf32>
    %c0_14 = arith.constant 0 : index
    %c0_15 = arith.constant 0 : index
    %14 = vector.load %arg7[%c0_14, %c0_15] : memref<32x32xf32, #tpu.memory_space<vmem>>, vector<32x32xf32>
    %c0_16 = arith.constant 0 : index
    %c0_17 = arith.constant 0 : index
    %15 = vector.load %arg8[%c0_16, %c0_17] : memref<1x32xf32, #tpu.memory_space<vmem>>, vector<1x32xf32>
    %16 = vector.shape_cast %15 : vector<1x32xf32> to vector<1x32xf32>
    %17 = vector.broadcast %16 : vector<1x32xf32> to vector<2x32xf32>
    %cst = arith.constant 0.000000e+00 : f32
    %18 = vector.broadcast %cst : f32 to vector<2x32xf32>
    %c0_18 = arith.constant 0 : index
    %c0_19 = arith.constant 0 : index
    %c0_20 = arith.constant 0 : index
    %c0_21 = arith.constant 0 : index
    %19 = vector.load %arg1[%c0_18, %c0_19, %c0_20, %c0_21] : memref<1x8x2x32xf32, #tpu.memory_space<vmem>>, vector<1x1x2x32xf32>
    %20 = vector.shape_cast %19 : vector<1x1x2x32xf32> to vector<2x32xf32>
    %cst_22 = arith.constant dense<0.000000e+00> : vector<2x96xf32>
    %21 = tpu.matmul %18, %1, %cst_22 {dimension_numbers = #tpu.dot_dimension_numbers<[1], [0], [0], [1], [0, 0, 1, 1], [], []>} : vector<2x32xf32>, vector<32x96xf32>, vector<2x96xf32> -> vector<2x96xf32>
    %cst_23 = arith.constant dense<0.000000e+00> : vector<2x96xf32>
    %22 = tpu.matmul %20, %3, %cst_23 {dimension_numbers = #tpu.dot_dimension_numbers<[1], [0], [0], [1], [0, 0, 1, 1], [], []>} : vector<2x32xf32>, vector<32x96xf32>, vector<2x96xf32> -> vector<2x96xf32>
    %23 = arith.addf %21, %22 : vector<2x96xf32>
    %24 = arith.addf %23, %7 : vector<2x96xf32>
    %25 = vector.extract_strided_slice %24 {offsets = [0, 0], sizes = [2, 32], strides = [1, 1]} : vector<2x96xf32> to vector<2x32xf32>
    %26 = arith.negf %25 : vector<2x32xf32>
    %27 = math.exp %26 : vector<2x32xf32>
    %cst_24 = arith.constant 1.000000e+00 : f32
    %28 = vector.broadcast %cst_24 : f32 to vector<2x32xf32>
    %29 = arith.addf %28, %27 : vector<2x32xf32>
    %30 = arith.divf %28, %29 : vector<2x32xf32>
    %31 = vector.extract_strided_slice %24 {offsets = [0, 32], sizes = [2, 32], strides = [1, 1]} : vector<2x96xf32> to vector<2x32xf32>
    %32 = math.tanh %31 : vector<2x32xf32>
    %33 = vector.extract_strided_slice %24 {offsets = [0, 64], sizes = [2, 32], strides = [1, 1]} : vector<2x96xf32> to vector<2x32xf32>
    %34 = arith.negf %33 : vector<2x32xf32>
    %35 = math.exp %34 : vector<2x32xf32>
    %cst_25 = arith.constant 1.000000e+00 : f32
    %36 = vector.broadcast %cst_25 : f32 to vector<2x32xf32>
    %37 = arith.addf %36, %35 : vector<2x32xf32>
    %38 = arith.divf %36, %37 : vector<2x32xf32>
    %39 = arith.mulf %30, %32 : vector<2x32xf32>
    %40 = math.tanh %39 : vector<2x32xf32>
    %41 = arith.mulf %38, %40 : vector<2x32xf32>
    %cst_26 = arith.constant dense<0.000000e+00> : vector<2x96xf32>
    %42 = tpu.matmul %41, %9, %cst_26 {dimension_numbers = #tpu.dot_dimension_numbers<[1], [0], [0], [1], [0, 0, 1, 1], [], []>} : vector<2x32xf32>, vector<32x96xf32>, vector<2x96xf32> -> vector<2x96xf32>
    %43 = arith.addf %42, %13 : vector<2x96xf32>
    %44 = vector.extract_strided_slice %43 {offsets = [0, 0], sizes = [2, 32], strides = [1, 1]} : vector<2x96xf32> to vector<2x32xf32>
    %45 = arith.negf %44 : vector<2x32xf32>
    %46 = math.exp %45 : vector<2x32xf32>
    %cst_27 = arith.constant 1.000000e+00 : f32
    %47 = vector.broadcast %cst_27 : f32 to vector<2x32xf32>
    %48 = arith.addf %47, %46 : vector<2x32xf32>
    %49 = arith.divf %47, %48 : vector<2x32xf32>
    %50 = vector.extract_strided_slice %43 {offsets = [0, 32], sizes = [2, 32], strides = [1, 1]} : vector<2x96xf32> to vector<2x32xf32>
    %51 = math.tanh %50 : vector<2x32xf32>
    %52 = vector.extract_strided_slice %43 {offsets = [0, 64], sizes = [2, 32], strides = [1, 1]} : vector<2x96xf32> to vector<2x32xf32>
    %53 = arith.negf %52 : vector<2x32xf32>
    %54 = math.exp %53 : vector<2x32xf32>
    %cst_28 = arith.constant 1.000000e+00 : f32
    %55 = vector.broadcast %cst_28 : f32 to vector<2x32xf32>
    %56 = arith.addf %55, %54 : vector<2x32xf32>
    %57 = arith.divf %55, %56 : vector<2x32xf32>
    %58 = arith.mulf %49, %51 : vector<2x32xf32>
    %59 = math.tanh %58 : vector<2x32xf32>
    %60 = arith.mulf %57, %59 : vector<2x32xf32>
    %cst_29 = arith.constant dense<0.000000e+00> : vector<2x32xf32>
    %61 = tpu.matmul %60, %14, %cst_29 {dimension_numbers = #tpu.dot_dimension_numbers<[1], [0], [0], [1], [0, 0, 1, 1], [], []>} : vector<2x32xf32>, vector<32x32xf32>, vector<2x32xf32> -> vector<2x32xf32>
    %62 = arith.addf %61, %17 : vector<2x32xf32>
    %c0_30 = arith.constant 0 : index
    %c0_31 = arith.constant 0 : index
    %c0_32 = arith.constant 0 : index
    %63 = vector.load %arg9[%c0_30, %c0_31, %c0_32] : memref<1x2x256xf32, #tpu.memory_space<vmem>>, vector<1x2x32xf32>
    %64 = vector.shape_cast %63 : vector<1x2x32xf32> to vector<2x32xf32>
    %65 = vector.shape_cast %62 : vector<2x32xf32> to vector<1x2x32xf32>
    tpu.vector_store %arg9[%c0_30, %c0_31, %c0_32], %65 {strides = array<i32>} : memref<1x2x256xf32, #tpu.memory_space<vmem>>, vector<1x2x32xf32>,
    %c0_33 = arith.constant 0 : index
    %c1 = arith.constant 1 : index
    %c0_34 = arith.constant 0 : index
    %c0_35 = arith.constant 0 : index
    %66 = vector.load %arg1[%c0_33, %c1, %c0_34, %c0_35] : memref<1x8x2x32xf32, #tpu.memory_space<vmem>>, vector<1x1x2x32xf32>
    %67 = vector.shape_cast %66 : vector<1x1x2x32xf32> to vector<2x32xf32>
    %cst_36 = arith.constant dense<0.000000e+00> : vector<2x96xf32>
    %68 = tpu.matmul %62, %1, %cst_36 {dimension_numbers = #tpu.dot_dimension_numbers<[1], [0], [0], [1], [0, 0, 1, 1], [], []>} : vector<2x32xf32>, vector<32x96xf32>, vector<2x96xf32> -> vector<2x96xf32>
    %cst_37 = arith.constant dense<0.000000e+00> : vector<2x96xf32>
    %69 = tpu.matmul %67, %3, %cst_37 {dimension_numbers = #tpu.dot_dimension_numbers<[1], [0], [0], [1], [0, 0, 1, 1], [], []>} : vector<2x32xf32>, vector<32x96xf32>, vector<2x96xf32> -> vector<2x96xf32>
    %70 = arith.addf %68, %69 : vector<2x96xf32>
    %71 = arith.addf %70, %7 : vector<2x96xf32>
    %72 = vector.extract_strided_slice %71 {offsets = [0, 0], sizes = [2, 32], strides = [1, 1]} : vector<2x96xf32> to vector<2x32xf32>
    %73 = arith.negf %72 : vector<2x32xf32>
    %74 = math.exp %73 : vector<2x32xf32>
    %cst_38 = arith.constant 1.000000e+00 : f32
    %75 = vector.broadcast %cst_38 : f32 to vector<2x32xf32>
    %76 = arith.addf %75, %74 : vector<2x32xf32>
    %77 = arith.divf %75, %76 : vector<2x32xf32>
    %78 = vector.extract_strided_slice %71 {offsets = [0, 32], sizes = [2, 32], strides = [1, 1]} : vector<2x96xf32> to vector<2x32xf32>
    %79 = math.tanh %78 : vector<2x32xf32>
    %80 = vector.extract_strided_slice %71 {offsets = [0, 64], sizes = [2, 32], strides = [1, 1]} : vector<2x96xf32> to vector<2x32xf32>
    %81 = arith.negf %80 : vector<2x32xf32>
    %82 = math.exp %81 : vector<2x32xf32>
    %cst_39 = arith.constant 1.000000e+00 : f32
    %83 = vector.broadcast %cst_39 : f32 to vector<2x32xf32>
    %84 = arith.addf %83, %82 : vector<2x32xf32>
    %85 = arith.divf %83, %84 : vector<2x32xf32>
    %86 = arith.mulf %77, %79 : vector<2x32xf32>
    %87 = math.tanh %86 : vector<2x32xf32>
    %88 = arith.mulf %85, %87 : vector<2x32xf32>
    %cst_40 = arith.constant dense<0.000000e+00> : vector<2x96xf32>
    %89 = tpu.matmul %88, %9, %cst_40 {dimension_numbers = #tpu.dot_dimension_numbers<[1], [0], [0], [1], [0, 0, 1, 1], [], []>} : vector<2x32xf32>, vector<32x96xf32>, vector<2x96xf32> -> vector<2x96xf32>
    %90 = arith.addf %89, %13 : vector<2x96xf32>
    %91 = vector.extract_strided_slice %90 {offsets = [0, 0], sizes = [2, 32], strides = [1, 1]} : vector<2x96xf32> to vector<2x32xf32>
    %92 = arith.negf %91 : vector<2x32xf32>
    %93 = math.exp %92 : vector<2x32xf32>
    %cst_41 = arith.constant 1.000000e+00 : f32
    %94 = vector.broadcast %cst_41 : f32 to vector<2x32xf32>
    %95 = arith.addf %94, %93 : vector<2x32xf32>
    %96 = arith.divf %94, %95 : vector<2x32xf32>
    %97 = vector.extract_strided_slice %90 {offsets = [0, 32], sizes = [2, 32], strides = [1, 1]} : vector<2x96xf32> to vector<2x32xf32>
    %98 = math.tanh %97 : vector<2x32xf32>
    %99 = vector.extract_strided_slice %90 {offsets = [0, 64], sizes = [2, 32], strides = [1, 1]} : vector<2x96xf32> to vector<2x32xf32>
    %100 = arith.negf %99 : vector<2x32xf32>
    %101 = math.exp %100 : vector<2x32xf32>
    %cst_42 = arith.constant 1.000000e+00 : f32
    %102 = vector.broadcast %cst_42 : f32 to vector<2x32xf32>
    %103 = arith.addf %102, %101 : vector<2x32xf32>
    %104 = arith.divf %102, %103 : vector<2x32xf32>
    %105 = arith.mulf %96, %98 : vector<2x32xf32>
    %106 = math.tanh %105 : vector<2x32xf32>
    %107 = arith.mulf %104, %106 : vector<2x32xf32>
    %cst_43 = arith.constant dense<0.000000e+00> : vector<2x32xf32>
    %108 = tpu.matmul %107, %14, %cst_43 {dimension_numbers = #tpu.dot_dimension_numbers<[1], [0], [0], [1], [0, 0, 1, 1], [], []>} : vector<2x32xf32>, vector<32x32xf32>, vector<2x32xf32> -> vector<2x32xf32>
    %109 = arith.addf %108, %17 : vector<2x32xf32>
    %c0_44 = arith.constant 0 : index
    %c0_45 = arith.constant 0 : index
    %c32 = arith.constant 32 : index
    %110 = vector.load %arg9[%c0_44, %c0_45, %c32] : memref<1x2x256xf32, #tpu.memory_space<vmem>>, vector<1x2x32xf32>
    %111 = vector.shape_cast %110 : vector<1x2x32xf32> to vector<2x32xf32>
    %112 = vector.shape_cast %109 : vector<2x32xf32> to vector<1x2x32xf32>
    tpu.vector_store %arg9[%c0_44, %c0_45, %c32], %112 {strides = array<i32>} : memref<1x2x256xf32, #tpu.memory_space<vmem>>, vector<1x2x32xf32>,
    %c0_46 = arith.constant 0 : index
    %c2 = arith.constant 2 : index
    %c0_47 = arith.constant 0 : index
    %c0_48 = arith.constant 0 : index
    %113 = vector.load %arg1[%c0_46, %c2, %c0_47, %c0_48] : memref<1x8x2x32xf32, #tpu.memory_space<vmem>>, vector<1x1x2x32xf32>
    %114 = vector.shape_cast %113 : vector<1x1x2x32xf32> to vector<2x32xf32>
    %cst_49 = arith.constant dense<0.000000e+00> : vector<2x96xf32>
    %115 = tpu.matmul %109, %1, %cst_49 {dimension_numbers = #tpu.dot_dimension_numbers<[1], [0], [0], [1], [0, 0, 1, 1], [], []>} : vector<2x32xf32>, vector<32x96xf32>, vector<2x96xf32> -> vector<2x96xf32>
    %cst_50 = arith.constant dense<0.000000e+00> : vector<2x96xf32>
    %116 = tpu.matmul %114, %3, %cst_50 {dimension_numbers = #tpu.dot_dimension_numbers<[1], [0], [0], [1], [0, 0, 1, 1], [], []>} : vector<2x32xf32>, vector<32x96xf32>, vector<2x96xf32> -> vector<2x96xf32>
    %117 = arith.addf %115, %116 : vector<2x96xf32>
    %118 = arith.addf %117, %7 : vector<2x96xf32>
    %119 = vector.extract_strided_slice %118 {offsets = [0, 0], sizes = [2, 32], strides = [1, 1]} : vector<2x96xf32> to vector<2x32xf32>
    %120 = arith.negf %119 : vector<2x32xf32>
    %121 = math.exp %120 : vector<2x32xf32>
    %cst_51 = arith.constant 1.000000e+00 : f32
    %122 = vector.broadcast %cst_51 : f32 to vector<2x32xf32>
    %123 = arith.addf %122, %121 : vector<2x32xf32>
    %124 = arith.divf %122, %123 : vector<2x32xf32>
    %125 = vector.extract_strided_slice %118 {offsets = [0, 32], sizes = [2, 32], strides = [1, 1]} : vector<2x96xf32> to vector<2x32xf32>
    %126 = math.tanh %125 : vector<2x32xf32>
    %127 = vector.extract_strided_slice %118 {offsets = [0, 64], sizes = [2, 32], strides = [1, 1]} : vector<2x96xf32> to vector<2x32xf32>
    %128 = arith.negf %127 : vector<2x32xf32>
    %129 = math.exp %128 : vector<2x32xf32>
    %cst_52 = arith.constant 1.000000e+00 : f32
    %130 = vector.broadcast %cst_52 : f32 to vector<2x32xf32>
    %131 = arith.addf %130, %129 : vector<2x32xf32>
    %132 = arith.divf %130, %131 : vector<2x32xf32>
    %133 = arith.mulf %124, %126 : vector<2x32xf32>
    %134 = math.tanh %133 : vector<2x32xf32>
    %135 = arith.mulf %132, %134 : vector<2x32xf32>
    %cst_53 = arith.constant dense<0.000000e+00> : vector<2x96xf32>
    %136 = tpu.matmul %135, %9, %cst_53 {dimension_numbers = #tpu.dot_dimension_numbers<[1], [0], [0], [1], [0, 0, 1, 1], [], []>} : vector<2x32xf32>, vector<32x96xf32>, vector<2x96xf32> -> vector<2x96xf32>
    %137 = arith.addf %136, %13 : vector<2x96xf32>
    %138 = vector.extract_strided_slice %137 {offsets = [0, 0], sizes = [2, 32], strides = [1, 1]} : vector<2x96xf32> to vector<2x32xf32>
    %139 = arith.negf %138 : vector<2x32xf32>
    %140 = math.exp %139 : vector<2x32xf32>
    %cst_54 = arith.constant 1.000000e+00 : f32
    %141 = vector.broadcast %cst_54 : f32 to vector<2x32xf32>
    %142 = arith.addf %141, %140 : vector<2x32xf32>
    %143 = arith.divf %141, %142 : vector<2x32xf32>
    %144 = vector.extract_strided_slice %137 {offsets = [0, 32], sizes = [2, 32], strides = [1, 1]} : vector<2x96xf32> to vector<2x32xf32>
    %145 = math.tanh %144 : vector<2x32xf32>
    %146 = vector.extract_strided_slice %137 {offsets = [0, 64], sizes = [2, 32], strides = [1, 1]} : vector<2x96xf32> to vector<2x32xf32>
    %147 = arith.negf %146 : vector<2x32xf32>
    %148 = math.exp %147 : vector<2x32xf32>
    %cst_55 = arith.constant 1.000000e+00 : f32
    %149 = vector.broadcast %cst_55 : f32 to vector<2x32xf32>
    %150 = arith.addf %149, %148 : vector<2x32xf32>
    %151 = arith.divf %149, %150 : vector<2x32xf32>
    %152 = arith.mulf %143, %145 : vector<2x32xf32>
    %153 = math.tanh %152 : vector<2x32xf32>
    %154 = arith.mulf %151, %153 : vector<2x32xf32>
    %cst_56 = arith.constant dense<0.000000e+00> : vector<2x32xf32>
    %155 = tpu.matmul %154, %14, %cst_56 {dimension_numbers = #tpu.dot_dimension_numbers<[1], [0], [0], [1], [0, 0, 1, 1], [], []>} : vector<2x32xf32>, vector<32x32xf32>, vector<2x32xf32> -> vector<2x32xf32>
    %156 = arith.addf %155, %17 : vector<2x32xf32>
    %c0_57 = arith.constant 0 : index
    %c0_58 = arith.constant 0 : index
    %c64 = arith.constant 64 : index
    %157 = vector.load %arg9[%c0_57, %c0_58, %c64] : memref<1x2x256xf32, #tpu.memory_space<vmem>>, vector<1x2x32xf32>
    %158 = vector.shape_cast %157 : vector<1x2x32xf32> to vector<2x32xf32>
    %159 = vector.shape_cast %156 : vector<2x32xf32> to vector<1x2x32xf32>
    tpu.vector_store %arg9[%c0_57, %c0_58, %c64], %159 {strides = array<i32>} : memref<1x2x256xf32, #tpu.memory_space<vmem>>, vector<1x2x32xf32>,
    %c0_59 = arith.constant 0 : index
    %c3 = arith.constant 3 : index
    %c0_60 = arith.constant 0 : index
    %c0_61 = arith.constant 0 : index
    %160 = vector.load %arg1[%c0_59, %c3, %c0_60, %c0_61] : memref<1x8x2x32xf32, #tpu.memory_space<vmem>>, vector<1x1x2x32xf32>
    %161 = vector.shape_cast %160 : vector<1x1x2x32xf32> to vector<2x32xf32>
    %cst_62 = arith.constant dense<0.000000e+00> : vector<2x96xf32>
    %162 = tpu.matmul %156, %1, %cst_62 {dimension_numbers = #tpu.dot_dimension_numbers<[1], [0], [0], [1], [0, 0, 1, 1], [], []>} : vector<2x32xf32>, vector<32x96xf32>, vector<2x96xf32> -> vector<2x96xf32>
    %cst_63 = arith.constant dense<0.000000e+00> : vector<2x96xf32>
    %163 = tpu.matmul %161, %3, %cst_63 {dimension_numbers = #tpu.dot_dimension_numbers<[1], [0], [0], [1], [0, 0, 1, 1], [], []>} : vector<2x32xf32>, vector<32x96xf32>, vector<2x96xf32> -> vector<2x96xf32>
    %164 = arith.addf %162, %163 : vector<2x96xf32>
    %165 = arith.addf %164, %7 : vector<2x96xf32>
    %166 = vector.extract_strided_slice %165 {offsets = [0, 0], sizes = [2, 32], strides = [1, 1]} : vector<2x96xf32> to vector<2x32xf32>
    %167 = arith.negf %166 : vector<2x32xf32>
    %168 = math.exp %167 : vector<2x32xf32>
    %cst_64 = arith.constant 1.000000e+00 : f32
    %169 = vector.broadcast %cst_64 : f32 to vector<2x32xf32>
    %170 = arith.addf %169, %168 : vector<2x32xf32>
    %171 = arith.divf %169, %170 : vector<2x32xf32>
    %172 = vector.extract_strided_slice %165 {offsets = [0, 32], sizes = [2, 32], strides = [1, 1]} : vector<2x96xf32> to vector<2x32xf32>
    %173 = math.tanh %172 : vector<2x32xf32>
    %174 = vector.extract_strided_slice %165 {offsets = [0, 64], sizes = [2, 32], strides = [1, 1]} : vector<2x96xf32> to vector<2x32xf32>
    %175 = arith.negf %174 : vector<2x32xf32>
    %176 = math.exp %175 : vector<2x32xf32>
    %cst_65 = arith.constant 1.000000e+00 : f32
    %177 = vector.broadcast %cst_65 : f32 to vector<2x32xf32>
    %178 = arith.addf %177, %176 : vector<2x32xf32>
    %179 = arith.divf %177, %178 : vector<2x32xf32>
    %180 = arith.mulf %171, %173 : vector<2x32xf32>
    %181 = math.tanh %180 : vector<2x32xf32>
    %182 = arith.mulf %179, %181 : vector<2x32xf32>
    %cst_66 = arith.constant dense<0.000000e+00> : vector<2x96xf32>
    %183 = tpu.matmul %182, %9, %cst_66 {dimension_numbers = #tpu.dot_dimension_numbers<[1], [0], [0], [1], [0, 0, 1, 1], [], []>} : vector<2x32xf32>, vector<32x96xf32>, vector<2x96xf32> -> vector<2x96xf32>
    %184 = arith.addf %183, %13 : vector<2x96xf32>
    %185 = vector.extract_strided_slice %184 {offsets = [0, 0], sizes = [2, 32], strides = [1, 1]} : vector<2x96xf32> to vector<2x32xf32>
    %186 = arith.negf %185 : vector<2x32xf32>
    %187 = math.exp %186 : vector<2x32xf32>
    %cst_67 = arith.constant 1.000000e+00 : f32
    %188 = vector.broadcast %cst_67 : f32 to vector<2x32xf32>
    %189 = arith.addf %188, %187 : vector<2x32xf32>
    %190 = arith.divf %188, %189 : vector<2x32xf32>
    %191 = vector.extract_strided_slice %184 {offsets = [0, 32], sizes = [2, 32], strides = [1, 1]} : vector<2x96xf32> to vector<2x32xf32>
    %192 = math.tanh %191 : vector<2x32xf32>
    %193 = vector.extract_strided_slice %184 {offsets = [0, 64], sizes = [2, 32], strides = [1, 1]} : vector<2x96xf32> to vector<2x32xf32>
    %194 = arith.negf %193 : vector<2x32xf32>
    %195 = math.exp %194 : vector<2x32xf32>
    %cst_68 = arith.constant 1.000000e+00 : f32
    %196 = vector.broadcast %cst_68 : f32 to vector<2x32xf32>
    %197 = arith.addf %196, %195 : vector<2x32xf32>
    %198 = arith.divf %196, %197 : vector<2x32xf32>
    %199 = arith.mulf %190, %192 : vector<2x32xf32>
    %200 = math.tanh %199 : vector<2x32xf32>
    %201 = arith.mulf %198, %200 : vector<2x32xf32>
    %cst_69 = arith.constant dense<0.000000e+00> : vector<2x32xf32>
    %202 = tpu.matmul %201, %14, %cst_69 {dimension_numbers = #tpu.dot_dimension_numbers<[1], [0], [0], [1], [0, 0, 1, 1], [], []>} : vector<2x32xf32>, vector<32x32xf32>, vector<2x32xf32> -> vector<2x32xf32>
    %203 = arith.addf %202, %17 : vector<2x32xf32>
    %c0_70 = arith.constant 0 : index
    %c0_71 = arith.constant 0 : index
    %c96 = arith.constant 96 : index
    %204 = vector.load %arg9[%c0_70, %c0_71, %c96] : memref<1x2x256xf32, #tpu.memory_space<vmem>>, vector<1x2x32xf32>
    %205 = vector.shape_cast %204 : vector<1x2x32xf32> to vector<2x32xf32>
    %206 = vector.shape_cast %203 : vector<2x32xf32> to vector<1x2x32xf32>
    tpu.vector_store %arg9[%c0_70, %c0_71, %c96], %206 {strides = array<i32>} : memref<1x2x256xf32, #tpu.memory_space<vmem>>, vector<1x2x32xf32>,
    %c0_72 = arith.constant 0 : index
    %c4 = arith.constant 4 : index
    %c0_73 = arith.constant 0 : index
    %c0_74 = arith.constant 0 : index
    %207 = vector.load %arg1[%c0_72, %c4, %c0_73, %c0_74] : memref<1x8x2x32xf32, #tpu.memory_space<vmem>>, vector<1x1x2x32xf32>
    %208 = vector.shape_cast %207 : vector<1x1x2x32xf32> to vector<2x32xf32>
    %cst_75 = arith.constant dense<0.000000e+00> : vector<2x96xf32>
    %209 = tpu.matmul %203, %1, %cst_75 {dimension_numbers = #tpu.dot_dimension_numbers<[1], [0], [0], [1], [0, 0, 1, 1], [], []>} : vector<2x32xf32>, vector<32x96xf32>, vector<2x96xf32> -> vector<2x96xf32>
    %cst_76 = arith.constant dense<0.000000e+00> : vector<2x96xf32>
    %210 = tpu.matmul %208, %3, %cst_76 {dimension_numbers = #tpu.dot_dimension_numbers<[1], [0], [0], [1], [0, 0, 1, 1], [], []>} : vector<2x32xf32>, vector<32x96xf32>, vector<2x96xf32> -> vector<2x96xf32>
    %211 = arith.addf %209, %210 : vector<2x96xf32>
    %212 = arith.addf %211, %7 : vector<2x96xf32>
    %213 = vector.extract_strided_slice %212 {offsets = [0, 0], sizes = [2, 32], strides = [1, 1]} : vector<2x96xf32> to vector<2x32xf32>
    %214 = arith.negf %213 : vector<2x32xf32>
    %215 = math.exp %214 : vector<2x32xf32>
    %cst_77 = arith.constant 1.000000e+00 : f32
    %216 = vector.broadcast %cst_77 : f32 to vector<2x32xf32>
    %217 = arith.addf %216, %215 : vector<2x32xf32>
    %218 = arith.divf %216, %217 : vector<2x32xf32>
    %219 = vector.extract_strided_slice %212 {offsets = [0, 32], sizes = [2, 32], strides = [1, 1]} : vector<2x96xf32> to vector<2x32xf32>
    %220 = math.tanh %219 : vector<2x32xf32>
    %221 = vector.extract_strided_slice %212 {offsets = [0, 64], sizes = [2, 32], strides = [1, 1]} : vector<2x96xf32> to vector<2x32xf32>
    %222 = arith.negf %221 : vector<2x32xf32>
    %223 = math.exp %222 : vector<2x32xf32>
    %cst_78 = arith.constant 1.000000e+00 : f32
    %224 = vector.broadcast %cst_78 : f32 to vector<2x32xf32>
    %225 = arith.addf %224, %223 : vector<2x32xf32>
    %226 = arith.divf %224, %225 : vector<2x32xf32>
    %227 = arith.mulf %218, %220 : vector<2x32xf32>
    %228 = math.tanh %227 : vector<2x32xf32>
    %229 = arith.mulf %226, %228 : vector<2x32xf32>
    %cst_79 = arith.constant dense<0.000000e+00> : vector<2x96xf32>
    %230 = tpu.matmul %229, %9, %cst_79 {dimension_numbers = #tpu.dot_dimension_numbers<[1], [0], [0], [1], [0, 0, 1, 1], [], []>} : vector<2x32xf32>, vector<32x96xf32>, vector<2x96xf32> -> vector<2x96xf32>
    %231 = arith.addf %230, %13 : vector<2x96xf32>
    %232 = vector.extract_strided_slice %231 {offsets = [0, 0], sizes = [2, 32], strides = [1, 1]} : vector<2x96xf32> to vector<2x32xf32>
    %233 = arith.negf %232 : vector<2x32xf32>
    %234 = math.exp %233 : vector<2x32xf32>
    %cst_80 = arith.constant 1.000000e+00 : f32
    %235 = vector.broadcast %cst_80 : f32 to vector<2x32xf32>
    %236 = arith.addf %235, %234 : vector<2x32xf32>
    %237 = arith.divf %235, %236 : vector<2x32xf32>
    %238 = vector.extract_strided_slice %231 {offsets = [0, 32], sizes = [2, 32], strides = [1, 1]} : vector<2x96xf32> to vector<2x32xf32>
    %239 = math.tanh %238 : vector<2x32xf32>
    %240 = vector.extract_strided_slice %231 {offsets = [0, 64], sizes = [2, 32], strides = [1, 1]} : vector<2x96xf32> to vector<2x32xf32>
    %241 = arith.negf %240 : vector<2x32xf32>
    %242 = math.exp %241 : vector<2x32xf32>
    %cst_81 = arith.constant 1.000000e+00 : f32
    %243 = vector.broadcast %cst_81 : f32 to vector<2x32xf32>
    %244 = arith.addf %243, %242 : vector<2x32xf32>
    %245 = arith.divf %243, %244 : vector<2x32xf32>
    %246 = arith.mulf %237, %239 : vector<2x32xf32>
    %247 = math.tanh %246 : vector<2x32xf32>
    %248 = arith.mulf %245, %247 : vector<2x32xf32>
    %cst_82 = arith.constant dense<0.000000e+00> : vector<2x32xf32>
    %249 = tpu.matmul %248, %14, %cst_82 {dimension_numbers = #tpu.dot_dimension_numbers<[1], [0], [0], [1], [0, 0, 1, 1], [], []>} : vector<2x32xf32>, vector<32x32xf32>, vector<2x32xf32> -> vector<2x32xf32>
    %250 = arith.addf %249, %17 : vector<2x32xf32>
    %c0_83 = arith.constant 0 : index
    %c0_84 = arith.constant 0 : index
    %c128 = arith.constant 128 : index
    %251 = vector.load %arg9[%c0_83, %c0_84, %c128] : memref<1x2x256xf32, #tpu.memory_space<vmem>>, vector<1x2x32xf32>
    %252 = vector.shape_cast %251 : vector<1x2x32xf32> to vector<2x32xf32>
    %253 = vector.shape_cast %250 : vector<2x32xf32> to vector<1x2x32xf32>
    tpu.vector_store %arg9[%c0_83, %c0_84, %c128], %253 {strides = array<i32>} : memref<1x2x256xf32, #tpu.memory_space<vmem>>, vector<1x2x32xf32>,
    %c0_85 = arith.constant 0 : index
    %c5 = arith.constant 5 : index
    %c0_86 = arith.constant 0 : index
    %c0_87 = arith.constant 0 : index
    %254 = vector.load %arg1[%c0_85, %c5, %c0_86, %c0_87] : memref<1x8x2x32xf32, #tpu.memory_space<vmem>>, vector<1x1x2x32xf32>
    %255 = vector.shape_cast %254 : vector<1x1x2x32xf32> to vector<2x32xf32>
    %cst_88 = arith.constant dense<0.000000e+00> : vector<2x96xf32>
    %256 = tpu.matmul %250, %1, %cst_88 {dimension_numbers = #tpu.dot_dimension_numbers<[1], [0], [0], [1], [0, 0, 1, 1], [], []>} : vector<2x32xf32>, vector<32x96xf32>, vector<2x96xf32> -> vector<2x96xf32>
    %cst_89 = arith.constant dense<0.000000e+00> : vector<2x96xf32>
    %257 = tpu.matmul %255, %3, %cst_89 {dimension_numbers = #tpu.dot_dimension_numbers<[1], [0], [0], [1], [0, 0, 1, 1], [], []>} : vector<2x32xf32>, vector<32x96xf32>, vector<2x96xf32> -> vector<2x96xf32>
    %258 = arith.addf %256, %257 : vector<2x96xf32>
    %259 = arith.addf %258, %7 : vector<2x96xf32>
    %260 = vector.extract_strided_slice %259 {offsets = [0, 0], sizes = [2, 32], strides = [1, 1]} : vector<2x96xf32> to vector<2x32xf32>
    %261 = arith.negf %260 : vector<2x32xf32>
    %262 = math.exp %261 : vector<2x32xf32>
    %cst_90 = arith.constant 1.000000e+00 : f32
    %263 = vector.broadcast %cst_90 : f32 to vector<2x32xf32>
    %264 = arith.addf %263, %262 : vector<2x32xf32>
    %265 = arith.divf %263, %264 : vector<2x32xf32>
    %266 = vector.extract_strided_slice %259 {offsets = [0, 32], sizes = [2, 32], strides = [1, 1]} : vector<2x96xf32> to vector<2x32xf32>
    %267 = math.tanh %266 : vector<2x32xf32>
    %268 = vector.extract_strided_slice %259 {offsets = [0, 64], sizes = [2, 32], strides = [1, 1]} : vector<2x96xf32> to vector<2x32xf32>
    %269 = arith.negf %268 : vector<2x32xf32>
    %270 = math.exp %269 : vector<2x32xf32>
    %cst_91 = arith.constant 1.000000e+00 : f32
    %271 = vector.broadcast %cst_91 : f32 to vector<2x32xf32>
    %272 = arith.addf %271, %270 : vector<2x32xf32>
    %273 = arith.divf %271, %272 : vector<2x32xf32>
    %274 = arith.mulf %265, %267 : vector<2x32xf32>
    %275 = math.tanh %274 : vector<2x32xf32>
    %276 = arith.mulf %273, %275 : vector<2x32xf32>
    %cst_92 = arith.constant dense<0.000000e+00> : vector<2x96xf32>
    %277 = tpu.matmul %276, %9, %cst_92 {dimension_numbers = #tpu.dot_dimension_numbers<[1], [0], [0], [1], [0, 0, 1, 1], [], []>} : vector<2x32xf32>, vector<32x96xf32>, vector<2x96xf32> -> vector<2x96xf32>
    %278 = arith.addf %277, %13 : vector<2x96xf32>
    %279 = vector.extract_strided_slice %278 {offsets = [0, 0], sizes = [2, 32], strides = [1, 1]} : vector<2x96xf32> to vector<2x32xf32>
    %280 = arith.negf %279 : vector<2x32xf32>
    %281 = math.exp %280 : vector<2x32xf32>
    %cst_93 = arith.constant 1.000000e+00 : f32
    %282 = vector.broadcast %cst_93 : f32 to vector<2x32xf32>
    %283 = arith.addf %282, %281 : vector<2x32xf32>
    %284 = arith.divf %282, %283 : vector<2x32xf32>
    %285 = vector.extract_strided_slice %278 {offsets = [0, 32], sizes = [2, 32], strides = [1, 1]} : vector<2x96xf32> to vector<2x32xf32>
    %286 = math.tanh %285 : vector<2x32xf32>
    %287 = vector.extract_strided_slice %278 {offsets = [0, 64], sizes = [2, 32], strides = [1, 1]} : vector<2x96xf32> to vector<2x32xf32>
    %288 = arith.negf %287 : vector<2x32xf32>
    %289 = math.exp %288 : vector<2x32xf32>
    %cst_94 = arith.constant 1.000000e+00 : f32
    %290 = vector.broadcast %cst_94 : f32 to vector<2x32xf32>
    %291 = arith.addf %290, %289 : vector<2x32xf32>
    %292 = arith.divf %290, %291 : vector<2x32xf32>
    %293 = arith.mulf %284, %286 : vector<2x32xf32>
    %294 = math.tanh %293 : vector<2x32xf32>
    %295 = arith.mulf %292, %294 : vector<2x32xf32>
    %cst_95 = arith.constant dense<0.000000e+00> : vector<2x32xf32>
    %296 = tpu.matmul %295, %14, %cst_95 {dimension_numbers = #tpu.dot_dimension_numbers<[1], [0], [0], [1], [0, 0, 1, 1], [], []>} : vector<2x32xf32>, vector<32x32xf32>, vector<2x32xf32> -> vector<2x32xf32>
    %297 = arith.addf %296, %17 : vector<2x32xf32>
    %c0_96 = arith.constant 0 : index
    %c0_97 = arith.constant 0 : index
    %c160 = arith.constant 160 : index
    %298 = vector.load %arg9[%c0_96, %c0_97, %c160] : memref<1x2x256xf32, #tpu.memory_space<vmem>>, vector<1x2x32xf32>
    %299 = vector.shape_cast %298 : vector<1x2x32xf32> to vector<2x32xf32>
    %300 = vector.shape_cast %297 : vector<2x32xf32> to vector<1x2x32xf32>
    tpu.vector_store %arg9[%c0_96, %c0_97, %c160], %300 {strides = array<i32>} : memref<1x2x256xf32, #tpu.memory_space<vmem>>, vector<1x2x32xf32>,
    %c0_98 = arith.constant 0 : index
    %c6 = arith.constant 6 : index
    %c0_99 = arith.constant 0 : index
    %c0_100 = arith.constant 0 : index
    %301 = vector.load %arg1[%c0_98, %c6, %c0_99, %c0_100] : memref<1x8x2x32xf32, #tpu.memory_space<vmem>>, vector<1x1x2x32xf32>
    %302 = vector.shape_cast %301 : vector<1x1x2x32xf32> to vector<2x32xf32>
    %cst_101 = arith.constant dense<0.000000e+00> : vector<2x96xf32>
    %303 = tpu.matmul %297, %1, %cst_101 {dimension_numbers = #tpu.dot_dimension_numbers<[1], [0], [0], [1], [0, 0, 1, 1], [], []>} : vector<2x32xf32>, vector<32x96xf32>, vector<2x96xf32> -> vector<2x96xf32>
    %cst_102 = arith.constant dense<0.000000e+00> : vector<2x96xf32>
    %304 = tpu.matmul %302, %3, %cst_102 {dimension_numbers = #tpu.dot_dimension_numbers<[1], [0], [0], [1], [0, 0, 1, 1], [], []>} : vector<2x32xf32>, vector<32x96xf32>, vector<2x96xf32> -> vector<2x96xf32>
    %305 = arith.addf %303, %304 : vector<2x96xf32>
    %306 = arith.addf %305, %7 : vector<2x96xf32>
    %307 = vector.extract_strided_slice %306 {offsets = [0, 0], sizes = [2, 32], strides = [1, 1]} : vector<2x96xf32> to vector<2x32xf32>
    %308 = arith.negf %307 : vector<2x32xf32>
    %309 = math.exp %308 : vector<2x32xf32>
    %cst_103 = arith.constant 1.000000e+00 : f32
    %310 = vector.broadcast %cst_103 : f32 to vector<2x32xf32>
    %311 = arith.addf %310, %309 : vector<2x32xf32>
    %312 = arith.divf %310, %311 : vector<2x32xf32>
    %313 = vector.extract_strided_slice %306 {offsets = [0, 32], sizes = [2, 32], strides = [1, 1]} : vector<2x96xf32> to vector<2x32xf32>
    %314 = math.tanh %313 : vector<2x32xf32>
    %315 = vector.extract_strided_slice %306 {offsets = [0, 64], sizes = [2, 32], strides = [1, 1]} : vector<2x96xf32> to vector<2x32xf32>
    %316 = arith.negf %315 : vector<2x32xf32>
    %317 = math.exp %316 : vector<2x32xf32>
    %cst_104 = arith.constant 1.000000e+00 : f32
    %318 = vector.broadcast %cst_104 : f32 to vector<2x32xf32>
    %319 = arith.addf %318, %317 : vector<2x32xf32>
    %320 = arith.divf %318, %319 : vector<2x32xf32>
    %321 = arith.mulf %312, %314 : vector<2x32xf32>
    %322 = math.tanh %321 : vector<2x32xf32>
    %323 = arith.mulf %320, %322 : vector<2x32xf32>
    %cst_105 = arith.constant dense<0.000000e+00> : vector<2x96xf32>
    %324 = tpu.matmul %323, %9, %cst_105 {dimension_numbers = #tpu.dot_dimension_numbers<[1], [0], [0], [1], [0, 0, 1, 1], [], []>} : vector<2x32xf32>, vector<32x96xf32>, vector<2x96xf32> -> vector<2x96xf32>
    %325 = arith.addf %324, %13 : vector<2x96xf32>
    %326 = vector.extract_strided_slice %325 {offsets = [0, 0], sizes = [2, 32], strides = [1, 1]} : vector<2x96xf32> to vector<2x32xf32>
    %327 = arith.negf %326 : vector<2x32xf32>
    %328 = math.exp %327 : vector<2x32xf32>
    %cst_106 = arith.constant 1.000000e+00 : f32
    %329 = vector.broadcast %cst_106 : f32 to vector<2x32xf32>
    %330 = arith.addf %329, %328 : vector<2x32xf32>
    %331 = arith.divf %329, %330 : vector<2x32xf32>
    %332 = vector.extract_strided_slice %325 {offsets = [0, 32], sizes = [2, 32], strides = [1, 1]} : vector<2x96xf32> to vector<2x32xf32>
    %333 = math.tanh %332 : vector<2x32xf32>
    %334 = vector.extract_strided_slice %325 {offsets = [0, 64], sizes = [2, 32], strides = [1, 1]} : vector<2x96xf32> to vector<2x32xf32>
    %335 = arith.negf %334 : vector<2x32xf32>
    %336 = math.exp %335 : vector<2x32xf32>
    %cst_107 = arith.constant 1.000000e+00 : f32
    %337 = vector.broadcast %cst_107 : f32 to vector<2x32xf32>
    %338 = arith.addf %337, %336 : vector<2x32xf32>
    %339 = arith.divf %337, %338 : vector<2x32xf32>
    %340 = arith.mulf %331, %333 : vector<2x32xf32>
    %341 = math.tanh %340 : vector<2x32xf32>
    %342 = arith.mulf %339, %341 : vector<2x32xf32>
    %cst_108 = arith.constant dense<0.000000e+00> : vector<2x32xf32>
    %343 = tpu.matmul %342, %14, %cst_108 {dimension_numbers = #tpu.dot_dimension_numbers<[1], [0], [0], [1], [0, 0, 1, 1], [], []>} : vector<2x32xf32>, vector<32x32xf32>, vector<2x32xf32> -> vector<2x32xf32>
    %344 = arith.addf %343, %17 : vector<2x32xf32>
    %c0_109 = arith.constant 0 : index
    %c0_110 = arith.constant 0 : index
    %c192 = arith.constant 192 : index
    %345 = vector.load %arg9[%c0_109, %c0_110, %c192] : memref<1x2x256xf32, #tpu.memory_space<vmem>>, vector<1x2x32xf32>
    %346 = vector.shape_cast %345 : vector<1x2x32xf32> to vector<2x32xf32>
    %347 = vector.shape_cast %344 : vector<2x32xf32> to vector<1x2x32xf32>
    tpu.vector_store %arg9[%c0_109, %c0_110, %c192], %347 {strides = array<i32>} : memref<1x2x256xf32, #tpu.memory_space<vmem>>, vector<1x2x32xf32>,
    %c0_111 = arith.constant 0 : index
    %c7 = arith.constant 7 : index
    %c0_112 = arith.constant 0 : index
    %c0_113 = arith.constant 0 : index
    %348 = vector.load %arg1[%c0_111, %c7, %c0_112, %c0_113] : memref<1x8x2x32xf32, #tpu.memory_space<vmem>>, vector<1x1x2x32xf32>
    %349 = vector.shape_cast %348 : vector<1x1x2x32xf32> to vector<2x32xf32>
    %cst_114 = arith.constant dense<0.000000e+00> : vector<2x96xf32>
    %350 = tpu.matmul %344, %1, %cst_114 {dimension_numbers = #tpu.dot_dimension_numbers<[1], [0], [0], [1], [0, 0, 1, 1], [], []>} : vector<2x32xf32>, vector<32x96xf32>, vector<2x96xf32> -> vector<2x96xf32>
    %cst_115 = arith.constant dense<0.000000e+00> : vector<2x96xf32>
    %351 = tpu.matmul %349, %3, %cst_115 {dimension_numbers = #tpu.dot_dimension_numbers<[1], [0], [0], [1], [0, 0, 1, 1], [], []>} : vector<2x32xf32>, vector<32x96xf32>, vector<2x96xf32> -> vector<2x96xf32>
    %352 = arith.addf %350, %351 : vector<2x96xf32>
    %353 = arith.addf %352, %7 : vector<2x96xf32>
    %354 = vector.extract_strided_slice %353 {offsets = [0, 0], sizes = [2, 32], strides = [1, 1]} : vector<2x96xf32> to vector<2x32xf32>
    %355 = arith.negf %354 : vector<2x32xf32>
    %356 = math.exp %355 : vector<2x32xf32>
    %cst_116 = arith.constant 1.000000e+00 : f32
    %357 = vector.broadcast %cst_116 : f32 to vector<2x32xf32>
    %358 = arith.addf %357, %356 : vector<2x32xf32>
    %359 = arith.divf %357, %358 : vector<2x32xf32>
    %360 = vector.extract_strided_slice %353 {offsets = [0, 32], sizes = [2, 32], strides = [1, 1]} : vector<2x96xf32> to vector<2x32xf32>
    %361 = math.tanh %360 : vector<2x32xf32>
    %362 = vector.extract_strided_slice %353 {offsets = [0, 64], sizes = [2, 32], strides = [1, 1]} : vector<2x96xf32> to vector<2x32xf32>
    %363 = arith.negf %362 : vector<2x32xf32>
    %364 = math.exp %363 : vector<2x32xf32>
    %cst_117 = arith.constant 1.000000e+00 : f32
    %365 = vector.broadcast %cst_117 : f32 to vector<2x32xf32>
    %366 = arith.addf %365, %364 : vector<2x32xf32>
    %367 = arith.divf %365, %366 : vector<2x32xf32>
    %368 = arith.mulf %359, %361 : vector<2x32xf32>
    %369 = math.tanh %368 : vector<2x32xf32>
    %370 = arith.mulf %367, %369 : vector<2x32xf32>
    %cst_118 = arith.constant dense<0.000000e+00> : vector<2x96xf32>
    %371 = tpu.matmul %370, %9, %cst_118 {dimension_numbers = #tpu.dot_dimension_numbers<[1], [0], [0], [1], [0, 0, 1, 1], [], []>} : vector<2x32xf32>, vector<32x96xf32>, vector<2x96xf32> -> vector<2x96xf32>
    %372 = arith.addf %371, %13 : vector<2x96xf32>
    %373 = vector.extract_strided_slice %372 {offsets = [0, 0], sizes = [2, 32], strides = [1, 1]} : vector<2x96xf32> to vector<2x32xf32>
    %374 = arith.negf %373 : vector<2x32xf32>
    %375 = math.exp %374 : vector<2x32xf32>
    %cst_119 = arith.constant 1.000000e+00 : f32
    %376 = vector.broadcast %cst_119 : f32 to vector<2x32xf32>
    %377 = arith.addf %376, %375 : vector<2x32xf32>
    %378 = arith.divf %376, %377 : vector<2x32xf32>
    %379 = vector.extract_strided_slice %372 {offsets = [0, 32], sizes = [2, 32], strides = [1, 1]} : vector<2x96xf32> to vector<2x32xf32>
    %380 = math.tanh %379 : vector<2x32xf32>
    %381 = vector.extract_strided_slice %372 {offsets = [0, 64], sizes = [2, 32], strides = [1, 1]} : vector<2x96xf32> to vector<2x32xf32>
    %382 = arith.negf %381 : vector<2x32xf32>
    %383 = math.exp %382 : vector<2x32xf32>
    %cst_120 = arith.constant 1.000000e+00 : f32
    %384 = vector.broadcast %cst_120 : f32 to vector<2x32xf32>
    %385 = arith.addf %384, %383 : vector<2x32xf32>
    %386 = arith.divf %384, %385 : vector<2x32xf32>
    %387 = arith.mulf %378, %380 : vector<2x32xf32>
    %388 = math.tanh %387 : vector<2x32xf32>
    %389 = arith.mulf %386, %388 : vector<2x32xf32>
    %cst_121 = arith.constant dense<0.000000e+00> : vector<2x32xf32>
    %390 = tpu.matmul %389, %14, %cst_121 {dimension_numbers = #tpu.dot_dimension_numbers<[1], [0], [0], [1], [0, 0, 1, 1], [], []>} : vector<2x32xf32>, vector<32x32xf32>, vector<2x32xf32> -> vector<2x32xf32>
    %391 = arith.addf %390, %17 : vector<2x32xf32>
    %c0_122 = arith.constant 0 : index
    %c0_123 = arith.constant 0 : index
    %c224 = arith.constant 224 : index
    %392 = vector.load %arg9[%c0_122, %c0_123, %c224] : memref<1x2x256xf32, #tpu.memory_space<vmem>>, vector<1x2x32xf32>
    %393 = vector.shape_cast %392 : vector<1x2x32xf32> to vector<2x32xf32>
    %394 = vector.shape_cast %391 : vector<2x32xf32> to vector<1x2x32xf32>
    tpu.vector_store %arg9[%c0_122, %c0_123, %c224], %394 {strides = array<i32>} : memref<1x2x256xf32, #tpu.memory_space<vmem>>, vector<1x2x32xf32>,
    return
  }
  func.func @transform_0(%arg0: i32) -> (i32, i32, i32, i32) {
    %c0_i32 = arith.constant 0 : i32
    %c0_i32_0 = arith.constant 0 : i32
    %c0_i32_1 = arith.constant 0 : i32
    %c0_i32_2 = arith.constant 0 : i32
    return %arg0, %c0_i32, %c0_i32_0, %c0_i32_1 : i32, i32, i32, i32
  }
  func.func @transform_1(%arg0: i32) -> (i32, i32, i32) {
    %c0_i32 = arith.constant 0 : i32
    %c0_i32_0 = arith.constant 0 : i32
    %c0_i32_1 = arith.constant 0 : i32
    return %arg0, %c0_i32, %c0_i32_0 : i32, i32, i32
  }
  func.func @transform_2(%arg0: i32) -> (i32, i32, i32) {
    %c0_i32 = arith.constant 0 : i32
    %c0_i32_0 = arith.constant 0 : i32
    %c0_i32_1 = arith.constant 0 : i32
    return %arg0, %c0_i32, %c0_i32_0 : i32, i32, i32
  }
  func.func @transform_3(%arg0: i32) -> (i32, i32, i32) {
    %c0_i32 = arith.constant 0 : i32
    %c0_i32_0 = arith.constant 0 : i32
    %c0_i32_1 = arith.constant 0 : i32
    return %arg0, %c0_i32, %c0_i32_0 : i32, i32, i32
  }
  func.func @transform_4(%arg0: i32) -> (i32, i32, i32) {
    %c0_i32 = arith.constant 0 : i32
    %c0_i32_0 = arith.constant 0 : i32
    %c0_i32_1 = arith.constant 0 : i32
    return %arg0, %c0_i32, %c0_i32_0 : i32, i32, i32
  }
  func.func @transform_5(%arg0: i32) -> (i32, i32, i32) {
    %c0_i32 = arith.constant 0 : i32
    %c0_i32_0 = arith.constant 0 : i32
    %c0_i32_1 = arith.constant 0 : i32
    return %arg0, %c0_i32, %c0_i32_0 : i32, i32, i32
  }
  func.func @transform_6(%arg0: i32) -> (i32, i32) {
    %c0_i32 = arith.constant 0 : i32
    %c0_i32_0 = arith.constant 0 : i32
    %c0_i32_1 = arith.constant 0 : i32
    return %c0_i32, %c0_i32_0 : i32, i32
  }
  func.func @transform_7(%arg0: i32) -> (i32, i32) {
    %c0_i32 = arith.constant 0 : i32
    %c0_i32_0 = arith.constant 0 : i32
    %c0_i32_1 = arith.constant 0 : i32
    return %c0_i32, %c0_i32_0 : i32, i32
  }
  func.func @transform_8(%arg0: i32) -> (i32, i32, i32) {
    %c0_i32 = arith.constant 0 : i32
    %c0_i32_0 = arith.constant 0 : i32
    %c0_i32_1 = arith.constant 0 : i32
    return %arg0, %c0_i32, %c0_i32_0 : i32, i32, i32
  }
}

</mosaic_0001>

<llo_original>
// kernel: squeeze.2
$region0: #{squeeze.2}
  %s0 = inlined_call_operand.vmem [shape: f32[1,2,256], index: 0, kind: input, shape index: {}]
  %s1 = inlined_call_operand.vmem [shape: f32[2,8,32], index: 1, kind: output, shape index: {}]
  $region1: #{squeeze.2} parent=0
    #allocation0 [shape = 'u8[8192]{0}', space=vmem, size = 0x2000, scoped, tag = 'scoped mem for input reshape']
    %s3 = ssub.s32 4, 1
    %s4 = scalar_lea.vmem %s0, 2
    %v5 = vld [vmem:[%s4] sm:%s3]
    %s6 = scalar_lea.vmem [#allocation0], 8
    %7 = vst [vmem:[%s6] sm:%s3] %v5
    %v8 = vld [vmem:[%s0] sm:%s3]
    %9 = vst [vmem:[#allocation0] sm:%s3] %v8
    %v10 = vld [vmem:[#allocation0] sm:$0x3]
    %vm11 = vcmask 261120
    %12 = vst.msk [vmem:[%s1] ss:$8 sm:$0x3] %vm11, %v10
    %s13 = scalar_lea.vmem [#allocation0], 8
    %v14 = vld [vmem:[%s13] sm:$0x3]
    %vm15 = vcmask 261120
    %s16 = scalar_lea.vmem %s1, 4
    %17 = vst.msk [vmem:[%s16] ss:$8 sm:$0x3] %vm15, %v14
    %v18 = vld.sshfl [vmem:[#allocation0] sm:$0xff pattern:$0x99999180]
    %19 = vrot.lane.b32.xlu0 %v18, 96
    %v20 = vpop.permute.xlu0 %19
    %vm21 = vcmask 261120
    %s22 = scalar_lea.vmem %s1, 1
    %23 = vst.msk [vmem:[%s22] ss:$4 sm:$0xf] %vm21, %v20
    %v24 = vld.sshfl [vmem:[#allocation0] sm:$0xff pattern:$0x99999180]
    %25 = vrot.lane.b32.xlu0 %v24, 64
    %v26 = vpop.permute.xlu0 %25
    %vm27 = vcmask 261120
    %s28 = scalar_lea.vmem %s1, 2
    %29 = vst.msk [vmem:[%s28] ss:$4 sm:$0xf] %vm27, %v26
    %v30 = vld.sshfl [vmem:[#allocation0] sm:$0xff pattern:$0x99999180]
    %31 = vrot.lane.b32.xlu0 %v30, 32
    %v32 = vpop.permute.xlu0 %31
    %vm33 = vcmask 261120
    %s34 = scalar_lea.vmem %s1, 3
    %35 = vst.msk [vmem:[%s34] ss:$4 sm:$0xf] %vm33, %v32

// kernel: decoder_rnn_forward.1
$region0: #{decoder_rnn_forward.1}
  #allocation0 [shape = 'u32[]', space=smem, size = 0x4, offset = 0x4, fixed_abs, tag = 'smem constant byte address 0x4 - core index']
  #allocation1 [shape = 'u32[72,128]{1,0:T(1,128)}', space=vmem, size = 0x9000, scoped, tag = 'internal scratch']
  %s0 = inlined_call_operand.vmem [shape: f32[2,8,2,32], index: 0, kind: input, shape index: {}]
  %s1 = inlined_call_operand.vmem [shape: f32[2,32,96], index: 1, kind: input, shape index: {}]
  %s2 = inlined_call_operand.vmem [shape: f32[2,32,96], index: 2, kind: input, shape index: {}]
  %s3 = inlined_call_operand.vmem [shape: f32[2,1,96], index: 3, kind: input, shape index: {}]
  %s4 = inlined_call_operand.vmem [shape: f32[2,32,96], index: 4, kind: input, shape index: {}]
  %s5 = inlined_call_operand.vmem [shape: f32[2,1,96], index: 5, kind: input, shape index: {}]
  %s6 = inlined_call_operand.vmem [shape: f32[32,32], index: 6, kind: input, shape index: {}]
  %s7 = inlined_call_operand.vmem [shape: f32[1,32], index: 7, kind: input, shape index: {}]
  %s8 = inlined_call_operand.vmem [shape: f32[2,2,256], index: 8, kind: output, shape index: {}]
  %s9 = sld [smem:[#allocation0]]
  $region65: #{decoder_rnn_forward.1} parent=0
    _
  %s11 = ssub.s32 1, %s9
  %s12 = scalar_select 0, %s11, %s9
  loop: start=0, step=1, limit=4
  $region2: #{decoder_rnn_forward.1} parent=0 // loop_pre_header
    _
  $region3: #{decoder_rnn_forward.1} parent=0 // loop_header
    %s14 = sphi 0, %s18
    %p15 = scmp.ge.s32.totalorder %s14, 4
    %s24 = sphi 0, %s26
    %s27 = sphi 0, %s24
    %s28 = sphi 0, %s27
    %s44 = sphi 0, %s28
    %s50 = sphi 0, %s52
    %s53 = sphi 0, %s50
    %s54 = sphi 0, %s53
    %s70 = sphi 0, %s54
    %s76 = sphi 0, %s78
    %s79 = sphi 0, %s76
    %s80 = sphi 0, %s79
    %s96 = sphi 0, %s80
    %s102 = sphi 0, %s104
    %s105 = sphi 0, %s102
    %s106 = sphi 0, %s105
    %s122 = sphi 0, %s106
    %s128 = sphi 0, %s130
    %s131 = sphi 0, %s128
    %s132 = sphi 0, %s131
    %s148 = sphi 0, %s132
    %s154 = sphi 0, %s156
    %s157 = sphi 0, %s154
    %s158 = sphi 0, %s157
    %s174 = sphi 0, %s158
    %s178 = sphi 0, %s178
    %s180 = sphi 0, %s178
    %s181 = sphi 0, %s180
    %s195 = sphi 0, %s181
    %s199 = sphi 0, %s199
    %s201 = sphi 0, %s199
    %s202 = sphi 0, %s201
    %s216 = sphi 0, %s202
    %s222 = sphi 0, %s224
    %s225 = sphi 0, %s222
    %s226 = sphi 0, %s225
    %s242 = sphi 0, %s226
  $region4: #{decoder_rnn_forward.1} parent=0 // loop_header_branch
    %17 = sbr.rel (%p15) target = $region8
  $region5: #{decoder_rnn_forward.1} parent=0 // loop_body
    %s19 = ssub.s32 %s14, 1
    %s20 = ssub.s32 %s14, 2
    %s21 = sadd.s32 %s14, 1
    %s22 = ssub.s32 %s14, %s21
    %p23 = scmp.eq.s32.totalorder %s22, 0
    %s25 = sadd.s32 %s24, 1
    %s26 = scalar_select %p23, %s24, %s25
    %p29 = pneg %p23
    %p30 = scmp.eq.s32.totalorder %s14, 1
    %p31 = por %p29, %p30
    %p32 = scmp.ne.s32.totalorder %s24, %s27
    %p33 = scmp.eq.s32.totalorder %s14, 0
    %p34 = por %p32, %p33
    %p35 = scmp.ne.s32.totalorder %s24, %s27
    %p36 = scmp.eq.s32.totalorder %s19, 1
    %p37 = por %p35, %p36
    %p38 = scmp.ne.s32.totalorder %s27, %s28
    %p39 = scmp.eq.s32.totalorder %s19, 0
    %p40 = por %p38, %p39
    %p41 = scmp.ne.s32.totalorder %s27, %s28
    %p42 = scmp.eq.s32.totalorder %s20, 1
    %p43 = por %p41, %p42
    %p45 = scmp.ne.s32.totalorder %s28, %s44
    %p46 = scmp.eq.s32.totalorder %s20, 0
    %p47 = por %p45, %p46
    %s48 = ssub.s32 %s14, %s21
    %p49 = scmp.eq.s32.totalorder %s48, 0
    %s51 = sadd.s32 %s50, 1
    %s52 = scalar_select %p49, %s50, %s51
    %p55 = pneg %p49
    %p56 = scmp.eq.s32.totalorder %s14, 1
    %p57 = por %p55, %p56
    %p58 = scmp.ne.s32.totalorder %s50, %s53
    %p59 = scmp.eq.s32.totalorder %s14, 0
    %p60 = por %p58, %p59
    %p61 = scmp.ne.s32.totalorder %s50, %s53
    %p62 = scmp.eq.s32.totalorder %s19, 1
    %p63 = por %p61, %p62
    %p64 = scmp.ne.s32.totalorder %s53, %s54
    %p65 = scmp.eq.s32.totalorder %s19, 0
    %p66 = por %p64, %p65
    %p67 = scmp.ne.s32.totalorder %s53, %s54
    %p68 = scmp.eq.s32.totalorder %s20, 1
    %p69 = por %p67, %p68
    %p71 = scmp.ne.s32.totalorder %s54, %s70
    %p72 = scmp.eq.s32.totalorder %s20, 0
    %p73 = por %p71, %p72
    %s74 = ssub.s32 %s14, %s21
    %p75 = scmp.eq.s32.totalorder %s74, 0
    %s77 = sadd.s32 %s76, 1
    %s78 = scalar_select %p75, %s76, %s77
    %p81 = pneg %p75
    %p82 = scmp.eq.s32.totalorder %s14, 1
    %p83 = por %p81, %p82
    %p84 = scmp.ne.s32.totalorder %s76, %s79
    %p85 = scmp.eq.s32.totalorder %s14, 0
    %p86 = por %p84, %p85
    %p87 = scmp.ne.s32.totalorder %s76, %s79
    %p88 = scmp.eq.s32.totalorder %s19, 1
    %p89 = por %p87, %p88
    %p90 = scmp.ne.s32.totalorder %s79, %s80
    %p91 = scmp.eq.s32.totalorder %s19, 0
    %p92 = por %p90, %p91
    %p93 = scmp.ne.s32.totalorder %s79, %s80
    %p94 = scmp.eq.s32.totalorder %s20, 1
    %p95 = por %p93, %p94
    %p97 = scmp.ne.s32.totalorder %s80, %s96
    %p98 = scmp.eq.s32.totalorder %s20, 0
    %p99 = por %p97, %p98
    %s100 = ssub.s32 %s14, %s21
    %p101 = scmp.eq.s32.totalorder %s100, 0
    %s103 = sadd.s32 %s102, 1
    %s104 = scalar_select %p101, %s102, %s103
    %p107 = pneg %p101
    %p108 = scmp.eq.s32.totalorder %s14, 1
    %p109 = por %p107, %p108
    %p110 = scmp.ne.s32.totalorder %s102, %s105
    %p111 = scmp.eq.s32.totalorder %s14, 0
    %p112 = por %p110, %p111
    %p113 = scmp.ne.s32.totalorder %s102, %s105
    %p114 = scmp.eq.s32.totalorder %s19, 1
    %p115 = por %p113, %p114
    %p116 = scmp.ne.s32.totalorder %s105, %s106
    %p117 = scmp.eq.s32.totalorder %s19, 0
    %p118 = por %p116, %p117
    %p119 = scmp.ne.s32.totalorder %s105, %s106
    %p120 = scmp.eq.s32.totalorder %s20, 1
    %p121 = por %p119, %p120
    %p123 = scmp.ne.s32.totalorder %s106, %s122
    %p124 = scmp.eq.s32.totalorder %s20, 0
    %p125 = por %p123, %p124
    %s126 = ssub.s32 %s14, %s21
    %p127 = scmp.eq.s32.totalorder %s126, 0
    %s129 = sadd.s32 %s128, 1
    %s130 = scalar_select %p127, %s128, %s129
    %p133 = pneg %p127
    %p134 = scmp.eq.s32.totalorder %s14, 1
    %p135 = por %p133, %p134
    %p136 = scmp.ne.s32.totalorder %s128, %s131
    %p137 = scmp.eq.s32.totalorder %s14, 0
    %p138 = por %p136, %p137
    %p139 = scmp.ne.s32.totalorder %s128, %s131
    %p140 = scmp.eq.s32.totalorder %s19, 1
    %p141 = por %p139, %p140
    %p142 = scmp.ne.s32.totalorder %s131, %s132
    %p143 = scmp.eq.s32.totalorder %s19, 0
    %p144 = por %p142, %p143
    %p145 = scmp.ne.s32.totalorder %s131, %s132
    %p146 = scmp.eq.s32.totalorder %s20, 1
    %p147 = por %p145, %p146
    %p149 = scmp.ne.s32.totalorder %s132, %s148
    %p150 = scmp.eq.s32.totalorder %s20, 0
    %p151 = por %p149, %p150
    %s152 = ssub.s32 %s14, %s21
    %p153 = scmp.eq.s32.totalorder %s152, 0
    %s155 = sadd.s32 %s154, 1
    %s156 = scalar_select %p153, %s154, %s155
    %p159 = pneg %p153
    %p160 = scmp.eq.s32.totalorder %s14, 1
    %p161 = por %p159, %p160
    %p162 = scmp.ne.s32.totalorder %s154, %s157
    %p163 = scmp.eq.s32.totalorder %s14, 0
    %p164 = por %p162, %p163
    %p165 = scmp.ne.s32.totalorder %s154, %s157
    %p166 = scmp.eq.s32.totalorder %s19, 1
    %p167 = por %p165, %p166
    %p168 = scmp.ne.s32.totalorder %s157, %s158
    %p169 = scmp.eq.s32.totalorder %s19, 0
    %p170 = por %p168, %p169
    %p171 = scmp.ne.s32.totalorder %s157, %s158
    %p172 = scmp.eq.s32.totalorder %s20, 1
    %p173 = por %p171, %p172
    %p175 = scmp.ne.s32.totalorder %s158, %s174
    %p176 = scmp.eq.s32.totalorder %s20, 0
    %p177 = por %p175, %p176
    %s179 = sadd.s32 %s178, 1
    %p182 = scmp.eq.s32.totalorder %s14, 1
    %p183 = scmp.ne.s32.totalorder %s178, %s180
    %p184 = scmp.eq.s32.totalorder %s14, 0
    %p185 = por %p183, %p184
    %p186 = scmp.ne.s32.totalorder %s178, %s180
    %p187 = scmp.eq.s32.totalorder %s19, 1
    %p188 = por %p186, %p187
    %p189 = scmp.ne.s32.totalorder %s180, %s181
    %p190 = scmp.eq.s32.totalorder %s19, 0
    %p191 = por %p189, %p190
    %p192 = scmp.ne.s32.totalorder %s180, %s181
    %p193 = scmp.eq.s32.totalorder %s20, 1
    %p194 = por %p192, %p193
    %p196 = scmp.ne.s32.totalorder %s181, %s195
    %p197 = scmp.eq.s32.totalorder %s20, 0
    %p198 = por %p196, %p197
    %s200 = sadd.s32 %s199, 1
    %p203 = scmp.eq.s32.totalorder %s14, 1
    %p204 = scmp.ne.s32.totalorder %s199, %s201
    %p205 = scmp.eq.s32.totalorder %s14, 0
    %p206 = por %p204, %p205
    %p207 = scmp.ne.s32.totalorder %s199, %s201
    %p208 = scmp.eq.s32.totalorder %s19, 1
    %p209 = por %p207, %p208
    %p210 = scmp.ne.s32.totalorder %s201, %s202
    %p211 = scmp.eq.s32.totalorder %s19, 0
    %p212 = por %p210, %p211
    %p213 = scmp.ne.s32.totalorder %s201, %s202
    %p214 = scmp.eq.s32.totalorder %s20, 1
    %p215 = por %p213, %p214
    %p217 = scmp.ne.s32.totalorder %s202, %s216
    %p218 = scmp.eq.s32.totalorder %s20, 0
    %p219 = por %p217, %p218
    %s220 = ssub.s32 %s14, %s21
    %p221 = scmp.eq.s32.totalorder %s220, 0
    %s223 = sadd.s32 %s222, 1
    %s224 = scalar_select %p221, %s222, %s223
    %p227 = pneg %p221
    %p228 = scmp.eq.s32.totalorder %s14, 1
    %p229 = por %p227, %p228
    %p230 = scmp.ne.s32.totalorder %s222, %s225
    %p231 = scmp.eq.s32.totalorder %s14, 0
    %p232 = por %p230, %p231
    %p233 = scmp.ne.s32.totalorder %s222, %s225
    %p234 = scmp.eq.s32.totalorder %s19, 1
    %p235 = por %p233, %p234
    %p236 = scmp.ne.s32.totalorder %s225, %s226
    %p237 = scmp.eq.s32.totalorder %s19, 0
    %p238 = por %p236, %p237
    %p239 = scmp.ne.s32.totalorder %s225, %s226
    %p240 = scmp.eq.s32.totalorder %s20, 1
    %p241 = por %p239, %p240
    %p243 = scmp.ne.s32.totalorder %s226, %s242
    %p244 = scmp.eq.s32.totalorder %s20, 0
    %p245 = por %p243, %p244
    %p246 = scmp.le.s32.totalorder 1, %s14
    %p247 = scmp.lt.s32.totalorder %s14, 3
    %p248 = pnand %p246, %p247
    %p249 = pneg %p248
    // Predicated region
    $region9: #{decoder_rnn_forward.1} parent=5 // pred_check
      _
    $region10: #{decoder_rnn_forward.1} parent=5 // pred_check_branch
      %251 = sbr.rel (%p248) target = $region12
    $region11: #{decoder_rnn_forward.1} parent=5 // pred_region
      %s252 = ssub.s32 %s14, 1
      // Predicated region
      $region13: #{decoder_rnn_forward.1} parent=11 // pred_check
        %p253 = pneg %p191
      $region14: #{decoder_rnn_forward.1} parent=11 // pred_check_branch
        %255 = sbr.rel (%p253) target = $region16
      $region15: #{decoder_rnn_forward.1} parent=11 // pred_region
        _
      $region16: #{decoder_rnn_forward.1} parent=11 // pred_fallthru
        _
      // Predicated region
      $region17: #{decoder_rnn_forward.1} parent=11 // pred_check
        %p256 = pneg %p212
      $region18: #{decoder_rnn_forward.1} parent=11 // pred_check_branch
        %258 = sbr.rel (%p256) target = $region20
      $region19: #{decoder_rnn_forward.1} parent=11 // pred_region
        _
      $region20: #{decoder_rnn_forward.1} parent=11 // pred_fallthru
        _
    $region12: #{decoder_rnn_forward.1} parent=5 // pred_fallthru
      _
    %p259 = scmp.lt.s32.totalorder %s14, 2
    // Predicated region
    $region21: #{decoder_rnn_forward.1} parent=5 // pred_check
      %p260 = pneg %p259
    $region22: #{decoder_rnn_forward.1} parent=5 // pred_check_branch
      %262 = sbr.rel (%p260) target = $region24
    $region23: #{decoder_rnn_forward.1} parent=5 // pred_region
      // Predicated region
      $region25: #{decoder_rnn_forward.1} parent=23 // pred_check
        %p263 = pneg %p34
      $region26: #{decoder_rnn_forward.1} parent=23 // pred_check_branch
        %265 = sbr.rel (%p263) target = $region28
      $region27: #{decoder_rnn_forward.1} parent=23 // pred_region
        %p266 = scmp.lt.s32.totalorder %s14, 1
        %s267 = scalar_select %p266, %s14, 1
        %s268 = smul.addr %s267, 8
        %s269 = smul.addr %s268, 2
        %s270 = scalar_lea.vmem %s0, %s269
      $region28: #{decoder_rnn_forward.1} parent=23 // pred_fallthru
        _
      // Predicated region
      $region29: #{decoder_rnn_forward.1} parent=23 // pred_check
        %p271 = pneg %p60
      $region30: #{decoder_rnn_forward.1} parent=23 // pred_check_branch
        %273 = sbr.rel (%p271) target = $region32
      $region31: #{decoder_rnn_forward.1} parent=23 // pred_region
        %p274 = scmp.lt.s32.totalorder %s14, 1
        %s275 = scalar_select %p274, %s14, 1
        %s276 = smul.addr %s275, 4
        %s277 = smul.addr %s276, 8
        %s278 = scalar_lea.vmem %s1, %s277
      $region32: #{decoder_rnn_forward.1} parent=23 // pred_fallthru
        _
      // Predicated region
      $region33: #{decoder_rnn_forward.1} parent=23 // pred_check
        %p279 = pneg %p86
      $region34: #{decoder_rnn_forward.1} parent=23 // pred_check_branch
        %281 = sbr.rel (%p279) target = $region36
      $region35: #{decoder_rnn_forward.1} parent=23 // pred_region
        %p282 = scmp.lt.s32.totalorder %s14, 1
        %s283 = scalar_select %p282, %s14, 1
        %s284 = smul.addr %s283, 4
        %s285 = smul.addr %s284, 8
        %s286 = scalar_lea.vmem %s2, %s285
      $region36: #{decoder_rnn_forward.1} parent=23 // pred_fallthru
        _
      // Predicated region
      $region37: #{decoder_rnn_forward.1} parent=23 // pred_check
        %p287 = pneg %p112
      $region38: #{decoder_rnn_forward.1} parent=23 // pred_check_branch
        %289 = sbr.rel (%p287) target = $region40
      $region39: #{decoder_rnn_forward.1} parent=23 // pred_region
        %p290 = scmp.lt.s32.totalorder %s14, 1
        %s291 = scalar_select %p290, %s14, 1
        %s292 = scalar_lea.vmem %s3, %s291
      $region40: #{decoder_rnn_forward.1} parent=23 // pred_fallthru
        _
      // Predicated region
      $region41: #{decoder_rnn_forward.1} parent=23 // pred_check
        %p293 = pneg %p138
      $region42: #{decoder_rnn_forward.1} parent=23 // pred_check_branch
        %295 = sbr.rel (%p293) target = $region44
      $region43: #{decoder_rnn_forward.1} parent=23 // pred_region
        %p296 = scmp.lt.s32.totalorder %s14, 1
        %s297 = scalar_select %p296, %s14, 1
        %s298 = smul.addr %s297, 4
        %s299 = smul.addr %s298, 8
        %s300 = scalar_lea.vmem %s4, %s299
      $region44: #{decoder_rnn_forward.1} parent=23 // pred_fallthru
        _
      // Predicated region
      $region45: #{decoder_rnn_forward.1} parent=23 // pred_check
        %p301 = pneg %p164
      $region46: #{decoder_rnn_forward.1} parent=23 // pred_check_branch
        %303 = sbr.rel (%p301) target = $region48
      $region47: #{decoder_rnn_forward.1} parent=23 // pred_region
        %p304 = scmp.lt.s32.totalorder %s14, 1
        %s305 = scalar_select %p304, %s14, 1
        %s306 = scalar_lea.vmem %s5, %s305
      $region48: #{decoder_rnn_forward.1} parent=23 // pred_fallthru
        _
    $region24: #{decoder_rnn_forward.1} parent=5 // pred_fallthru
      _
    %p307 = scmp.le.s32.totalorder 1, %s14
    %p308 = scmp.lt.s32.totalorder %s14, 3
    %p309 = pnand %p307, %p308
    %p310 = pneg %p309
    // Predicated region
    $region49: #{decoder_rnn_forward.1} parent=5 // pred_check
      _
    $region50: #{decoder_rnn_forward.1} parent=5 // pred_check_branch
      %312 = sbr.rel (%p309) target = $region52
    $region51: #{decoder_rnn_forward.1} parent=5 // pred_region
      %s313 = ssub.s32 %s14, 1
      %p314 = scmp.lt.s32.totalorder %s19, 1
      %s315 = scalar_select %p314, %s19, 1
      %s316 = smul.addr %s315, 8
      %s317 = smul.addr %s316, 2
      %s318 = scalar_lea.vmem %s0, %s317
      %p319 = pneg %p40
      %p320 = pneg %p37
      %p321 = scmp.lt.s32.totalorder %s19, 1
      %s322 = scalar_select %p321, %s19, 1
      %s323 = smul.addr %s322, 4
      %s324 = smul.addr %s323, 8
      %s325 = scalar_lea.vmem %s1, %s324
      %p326 = pneg %p66
      %p327 = pneg %p63
      %p328 = scmp.lt.s32.totalorder %s19, 1
      %s329 = scalar_select %p328, %s19, 1
      %s330 = smul.addr %s329, 4
      %s331 = smul.addr %s330, 8
      %s332 = scalar_lea.vmem %s2, %s331
      %p333 = pneg %p92
      %p334 = pneg %p89
      %p335 = scmp.lt.s32.totalorder %s19, 1
      %s336 = scalar_select %p335, %s19, 1
      %s337 = scalar_lea.vmem %s3, %s336
      %p338 = pneg %p118
      %p339 = pneg %p115
      %p340 = scmp.lt.s32.totalorder %s19, 1
      %s341 = scalar_select %p340, %s19, 1
      %s342 = smul.addr %s341, 4
      %s343 = smul.addr %s342, 8
      %s344 = scalar_lea.vmem %s4, %s343
      %p345 = pneg %p144
      %p346 = pneg %p141
      %p347 = scmp.lt.s32.totalorder %s19, 1
      %s348 = scalar_select %p347, %s19, 1
      %s349 = scalar_lea.vmem %s5, %s348
      %p350 = pneg %p170
      %p351 = pneg %p167
      %p352 = pneg %p191
      %p353 = pneg %p188
      %p354 = pneg %p212
      %p355 = pneg %p209
      %p356 = pneg %p238
      %p357 = pneg %p235
      %p358 = scmp.lt.s32.totalorder %s19, 1
      %s359 = scalar_select %p358, %s19, 1
      %s360 = smul.addr %s359, 2
      %s361 = smul.addr %s360, 2
      %s362 = scalar_lea.vmem %s8, %s361
      %p363 = scmp.lt.s32.totalorder %s19, 1
      %s364 = scalar_select %p363, %s19, 1
      %s365 = smul.addr %s364, 8
      %s366 = smul.addr %s365, 2
      %s367 = scalar_lea.vmem %s0, %s366
      %p368 = scmp.lt.s32.totalorder %s19, 1
      %s369 = scalar_select %p368, %s19, 1
      %s370 = smul.addr %s369, 4
      %s371 = smul.addr %s370, 8
      %s372 = scalar_lea.vmem %s1, %s371
      %p373 = scmp.lt.s32.totalorder %s19, 1
      %s374 = scalar_select %p373, %s19, 1
      %s375 = smul.addr %s374, 4
      %s376 = smul.addr %s375, 8
      %s377 = scalar_lea.vmem %s2, %s376
      %p378 = scmp.lt.s32.totalorder %s19, 1
      %s379 = scalar_select %p378, %s19, 1
      %s380 = scalar_lea.vmem %s3, %s379
      %p381 = scmp.lt.s32.totalorder %s19, 1
      %s382 = scalar_select %p381, %s19, 1
      %s383 = smul.addr %s382, 4
      %s384 = smul.addr %s383, 8
      %s385 = scalar_lea.vmem %s4, %s384
      %p386 = scmp.lt.s32.totalorder %s19, 1
      %s387 = scalar_select %p386, %s19, 1
      %s388 = scalar_lea.vmem %s5, %s387
      %p389 = scmp.lt.s32.totalorder %s19, 1
      %s390 = scalar_select %p389, %s19, 1
      %s391 = smul.addr %s390, 2
      %s392 = smul.addr %s391, 2
      %s393 = scalar_lea.vmem %s8, %s392
      %v394 = vld [vmem:[%s372] sm:$0xff]
      %v395 = vld [vmem:[%s372 + $0x8] sm:$0xff]
      %v396 = vld [vmem:[%s372 + $0x10] sm:$0xff]
      %v397 = vld [vmem:[%s372 + $0x18] sm:$0xff]
      %v398 = vld [vmem:[%s377] sm:$0xff]
      %v399 = vld [vmem:[%s377 + $0x8] sm:$0xff]
      %v400 = vld [vmem:[%s377 + $0x10] sm:$0xff]
      %v401 = vld [vmem:[%s377 + $0x18] sm:$0xff]
      %v402 = vld [vmem:[%s380] sm:$0x1]
      %v404 = vperm.slane %v402, 0
      %v406 = vld [vmem:[%s385] sm:$0xff]
      %v407 = vld [vmem:[%s385 + $0x8] sm:$0xff]
      %v408 = vld [vmem:[%s385 + $0x10] sm:$0xff]
      %v409 = vld [vmem:[%s385 + $0x18] sm:$0xff]
      %v410 = vld [vmem:[%s388] sm:$0x1]
      %v412 = vperm.slane %v410, 0
      %v414 = vld [vmem:[%s6] sm:$0xff]
      %v415 = vld [vmem:[%s6 + $0x8] sm:$0xff]
      %v416 = vld [vmem:[%s6 + $0x10] sm:$0xff]
      %v417 = vld [vmem:[%s6 + $0x18] sm:$0xff]
      %v418 = vld [vmem:[%s7] sm:$0x1]
      %v420 = vperm.slane %v418, 0
      %v422 = vld [vmem:[%s367] sm:$0x3]
      %vm423 = vcmask 261120
      %v425 = vsel %vm423, %v422, 0
      %427 = vmatpush.msra.mxu0 0.0
      %428 = vmatpush.msra.mxu0 0.0
      %429 = vmatpush.msra.mxu0 0.0
      %430 = vmatpush.msra.mxu0 0.0
      %431 = vmatpush.msra.mxu0 0.0
      %432 = vmatpush.msra.mxu0 0.0
      %433 = vmatpush.msra.mxu0 0.0
      %434 = vmatpush.msra.mxu0 0.0
      %435 = vmatpush.msra.mxu0 0.0
      %436 = vmatpush.msra.mxu0 0.0
      %437 = vmatpush.msra.mxu0 0.0
      %438 = vmatpush.msra.mxu0 0.0
      %439 = vmatpush.msra.mxu0 %v401
      %440 = vmatpush.msra.mxu0 %v400
      %441 = vmatpush.msra.mxu0 %v399
      %442 = vmatpush.msra.mxu0 %v398
      %443 = vmatmul.f32.gmra.mxu0 %v425
      %v444 = vpop.f32.mrf.mxu0
      %v445 = vadd.f32 0.0, %v444
      %446 = vdwg.mxu0
      %v448 = vsel %vm423, 0.0, 0
      %450 = vmatpush.msra.mxu0 0.0
      %451 = vmatpush.msra.mxu0 0.0
      %452 = vmatpush.msra.mxu0 0.0
      %453 = vmatpush.msra.mxu0 0.0
      %454 = vmatpush.msra.mxu0 0.0
      %455 = vmatpush.msra.mxu0 0.0
      %456 = vmatpush.msra.mxu0 0.0
      %457 = vmatpush.msra.mxu0 0.0
      %458 = vmatpush.msra.mxu0 0.0
      %459 = vmatpush.msra.mxu0 0.0
      %460 = vmatpush.msra.mxu0 0.0
      %461 = vmatpush.msra.mxu0 0.0
      %462 = vmatpush.msra.mxu0 %v397
      %463 = vmatpush.msra.mxu0 %v396
      %464 = vmatpush.msra.mxu0 %v395
      %465 = vmatpush.msra.mxu0 %v394
      %466 = vmatmul.f32.gmra.mxu0 %v448
      %v467 = vpop.f32.mrf.mxu0
      %v468 = vadd.f32 %v445, %v467
      %469 = vdwg.mxu0
      %v470 = vadd.f32 %v468, %v404
      %v471 = vxor.u32 %v470, 2147483648
      %v472 = vmul.f32 %v471, 1.442695
      %v473 = vpow.pop %v472
      %v474 = vadd.f32 %v473, 1.0
      %v475 = vrcp.pop %v474
      %v476 = vmul.f32 %v474, %v475
      %v477 = vsub.f32 1.0, %v476
      %v478 = vmul.f32 %v475, %v477
      %v479 = vadd.f32 %v475, %v478
      %vm480 = vweird.f32 %v474
      %vm481 = vweird.f32 %v475
      %vm482 = vmor %vm480, %vm481
      %v483 = vsel %vm482, %v475, %v479
      %v484 = vand.u32 2147483647, %v474
      %vm485 = vcmp.eq.f32.partialorder %v484, 8.507059e+37
      %v486 = vand.u32 %v474, 2147483648
      %v487 = vor.u32 1.1754944e-38, %v486
      %v488 = vsel %vm485, %v487, %v483
      %v489 = vmul.f32 1.0, %v488
      %v490 = vtanh.pop %v470
      %492 = vrot.lane.b32.xlu0 %v490, 96
      %v493 = vpop.permute.xlu0 %492
      %v495 = vmul.f32 %v489, %v493
      %v496 = vtanh.pop %v495
      %498 = vrot.lane.b32.xlu0 %v496, 64
      %v499 = vpop.permute.xlu0 %498
      %v501 = vmul.f32 %v489, %v499
      %503 = vrot.lane.b32.xlu0 %v501, 64
      %v504 = vpop.permute.xlu0 %503
      %v505 = vsel %vm423, %v504, 0
      %507 = vmatpush.msra.mxu0 0.0
      %508 = vmatpush.msra.mxu0 0.0
      %509 = vmatpush.msra.mxu0 0.0
      %510 = vmatpush.msra.mxu0 0.0
      %511 = vmatpush.msra.mxu0 0.0
      %512 = vmatpush.msra.mxu0 0.0
      %513 = vmatpush.msra.mxu0 0.0
      %514 = vmatpush.msra.mxu0 0.0
      %515 = vmatpush.msra.mxu0 0.0
      %516 = vmatpush.msra.mxu0 0.0
      %517 = vmatpush.msra.mxu0 0.0
      %518 = vmatpush.msra.mxu0 0.0
      %519 = vmatpush.msra.mxu0 %v409
      %520 = vmatpush.msra.mxu0 %v408
      %521 = vmatpush.msra.mxu0 %v407
      %522 = vmatpush.msra.mxu0 %v406
      %523 = vmatmul.f32.gmra.mxu0 %v505
      %v524 = vpop.f32.mrf.mxu0
      %v525 = vadd.f32 %v412, %v524
      %526 = vdwg.mxu0
      %v527 = vxor.u32 %v525, 2147483648
      %v528 = vmul.f32 %v527, 1.442695
      %v529 = vpow.pop %v528
      %v530 = vadd.f32 %v529, 1.0
      %v531 = vrcp.pop %v530
      %v532 = vmul.f32 %v530, %v531
      %v533 = vsub.f32 1.0, %v532
      %v534 = vmul.f32 %v531, %v533
      %v535 = vadd.f32 %v531, %v534
      %vm536 = vweird.f32 %v530
      %vm537 = vweird.f32 %v531
      %vm538 = vmor %vm536, %vm537
      %v539 = vsel %vm538, %v531, %v535
      %v540 = vand.u32 2147483647, %v530
      %vm541 = vcmp.eq.f32.partialorder %v540, 8.507059e+37
      %v542 = vand.u32 %v530, 2147483648
      %v543 = vor.u32 1.1754944e-38, %v542
      %v544 = vsel %vm541, %v543, %v539
      %v545 = vmul.f32 1.0, %v544
      %v546 = vtanh.pop %v525
      %548 = vrot.lane.b32.xlu0 %v546, 96
      %v549 = vpop.permute.xlu0 %548
      %v551 = vmul.f32 %v545, %v549
      %v552 = vtanh.pop %v551
      %554 = vrot.lane.b32.xlu0 %v552, 64
      %v555 = vpop.permute.xlu0 %554
      %v557 = vmul.f32 %v545, %v555
      %559 = vrot.lane.b32.xlu0 %v557, 64
      %v560 = vpop.permute.xlu0 %559
      %v561 = vsel %vm423, %v560, 0
      %563 = vmatpush.msra.mxu0 0.0
      %564 = vmatpush.msra.mxu0 0.0
      %565 = vmatpush.msra.mxu0 0.0
      %566 = vmatpush.msra.mxu0 0.0
      %567 = vmatpush.msra.mxu0 0.0
      %568 = vmatpush.msra.mxu0 0.0
      %569 = vmatpush.msra.mxu0 0.0
      %570 = vmatpush.msra.mxu0 0.0
      %571 = vmatpush.msra.mxu0 0.0
      %572 = vmatpush.msra.mxu0 0.0
      %573 = vmatpush.msra.mxu0 0.0
      %574 = vmatpush.msra.mxu0 0.0
      %575 = vmatpush.msra.mxu0 %v417
      %576 = vmatpush.msra.mxu0 %v416
      %577 = vmatpush.msra.mxu0 %v415
      %578 = vmatpush.msra.mxu0 %v414
      %579 = vmatmul.f32.gmra.mxu0 %v561
      %v580 = vpop.f32.mrf.mxu0
      %v581 = vadd.f32 %v420, %v580
      %582 = vdwg.mxu0
      %vm583 = vcmask 254976
      %584 = vst.msk [vmem:[%s393] sm:$0x3] %vm583, %v581
      %s585 = scalar_lea.vmem %s367, 2
      %v586 = vld [vmem:[%s585] sm:$0x3]
      %v588 = vsel %vm423, %v586, 0
      %590 = vmatpush.msra.mxu0 0.0
      %591 = vmatpush.msra.mxu0 0.0
      %592 = vmatpush.msra.mxu0 0.0
      %593 = vmatpush.msra.mxu0 0.0
      %594 = vmatpush.msra.mxu0 0.0
      %595 = vmatpush.msra.mxu0 0.0
      %596 = vmatpush.msra.mxu0 0.0
      %597 = vmatpush.msra.mxu0 0.0
      %598 = vmatpush.msra.mxu0 0.0
      %599 = vmatpush.msra.mxu0 0.0
      %600 = vmatpush.msra.mxu0 0.0
      %601 = vmatpush.msra.mxu0 0.0
      %602 = vmatpush.msra.mxu0 %v401
      %603 = vmatpush.msra.mxu0 %v400
      %604 = vmatpush.msra.mxu0 %v399
      %605 = vmatpush.msra.mxu0 %v398
      %606 = vmatmul.f32.gmra.mxu0 %v588
      %v607 = vpop.f32.mrf.mxu0
      %v608 = vadd.f32 0.0, %v607
      %609 = vdwg.mxu0
      %v611 = vsel %vm423, %v581, 0
      %613 = vmatpush.msra.mxu0 0.0
      %614 = vmatpush.msra.mxu0 0.0
      %615 = vmatpush.msra.mxu0 0.0
      %616 = vmatpush.msra.mxu0 0.0
      %617 = vmatpush.msra.mxu0 0.0
      %618 = vmatpush.msra.mxu0 0.0
      %619 = vmatpush.msra.mxu0 0.0
      %620 = vmatpush.msra.mxu0 0.0
      %621 = vmatpush.msra.mxu0 0.0
      %622 = vmatpush.msra.mxu0 0.0
      %623 = vmatpush.msra.mxu0 0.0
      %624 = vmatpush.msra.mxu0 0.0
      %625 = vmatpush.msra.mxu0 %v397
      %626 = vmatpush.msra.mxu0 %v396
      %627 = vmatpush.msra.mxu0 %v395
      %628 = vmatpush.msra.mxu0 %v394
      %629 = vmatmul.f32.gmra.mxu0 %v611
      %v630 = vpop.f32.mrf.mxu0
      %v631 = vadd.f32 %v608, %v630
      %632 = vdwg.mxu0
      %v633 = vadd.f32 %v631, %v404
      %v634 = vxor.u32 %v633, 2147483648
      %v635 = vmul.f32 %v634, 1.442695
      %v636 = vpow.pop %v635
      %v637 = vadd.f32 %v636, 1.0
      %v638 = vrcp.pop %v637
      %v639 = vmul.f32 %v637, %v638
      %v640 = vsub.f32 1.0, %v639
      %v641 = vmul.f32 %v638, %v640
      %v642 = vadd.f32 %v638, %v641
      %vm643 = vweird.f32 %v637
      %vm644 = vweird.f32 %v638
      %vm645 = vmor %vm643, %vm644
      %v646 = vsel %vm645, %v638, %v642
      %v647 = vand.u32 2147483647, %v637
      %vm648 = vcmp.eq.f32.partialorder %v647, 8.507059e+37
      %v649 = vand.u32 %v637, 2147483648
      %v650 = vor.u32 1.1754944e-38, %v649
      %v651 = vsel %vm648, %v650, %v646
      %v652 = vmul.f32 1.0, %v651
      %v653 = vtanh.pop %v633
      %655 = vrot.lane.b32.xlu0 %v653, 96
      %v656 = vpop.permute.xlu0 %655
      %v658 = vmul.f32 %v652, %v656
      %v659 = vtanh.pop %v658
      %661 = vrot.lane.b32.xlu0 %v659, 64
      %v662 = vpop.permute.xlu0 %661
      %v664 = vmul.f32 %v652, %v662
      %666 = vrot.lane.b32.xlu0 %v664, 64
      %v667 = vpop.permute.xlu0 %666
      %v668 = vsel %vm423, %v667, 0
      %670 = vmatpush.msra.mxu0 0.0
      %671 = vmatpush.msra.mxu0 0.0
      %672 = vmatpush.msra.mxu0 0.0
      %673 = vmatpush.msra.mxu0 0.0
      %674 = vmatpush.msra.mxu0 0.0
      %675 = vmatpush.msra.mxu0 0.0
      %676 = vmatpush.msra.mxu0 0.0
      %677 = vmatpush.msra.mxu0 0.0
      %678 = vmatpush.msra.mxu0 0.0
      %679 = vmatpush.msra.mxu0 0.0
      %680 = vmatpush.msra.mxu0 0.0
      %681 = vmatpush.msra.mxu0 0.0
      %682 = vmatpush.msra.mxu0 %v409
      %683 = vmatpush.msra.mxu0 %v408
      %684 = vmatpush.msra.mxu0 %v407
      %685 = vmatpush.msra.mxu0 %v406
      %686 = vmatmul.f32.gmra.mxu0 %v668
      %v687 = vpop.f32.mrf.mxu0
      %v688 = vadd.f32 %v412, %v687
      %689 = vdwg.mxu0
      %v690 = vxor.u32 %v688, 2147483648
      %v691 = vmul.f32 %v690, 1.442695
      %v692 = vpow.pop %v691
      %v693 = vadd.f32 %v692, 1.0
      %v694 = vrcp.pop %v693
      %v695 = vmul.f32 %v693, %v694
      %v696 = vsub.f32 1.0, %v695
      %v697 = vmul.f32 %v694, %v696
      %v698 = vadd.f32 %v694, %v697
      %vm699 = vweird.f32 %v693
      %vm700 = vweird.f32 %v694
      %vm701 = vmor %vm699, %vm700
      %v702 = vsel %vm701, %v694, %v698
      %v703 = vand.u32 2147483647, %v693
      %vm704 = vcmp.eq.f32.partialorder %v703, 8.507059e+37
      %v705 = vand.u32 %v693, 2147483648
      %v706 = vor.u32 1.1754944e-38, %v705
      %v707 = vsel %vm704, %v706, %v702
      %v708 = vmul.f32 1.0, %v707
      %v709 = vtanh.pop %v688
      %711 = vrot.lane.b32.xlu0 %v709, 96
      %v712 = vpop.permute.xlu0 %711
      %v714 = vmul.f32 %v708, %v712
      %v715 = vtanh.pop %v714
      %717 = vrot.lane.b32.xlu0 %v715, 64
      %v718 = vpop.permute.xlu0 %717
      %v720 = vmul.f32 %v708, %v718
      %722 = vrot.lane.b32.xlu0 %v720, 64
      %v723 = vpop.permute.xlu0 %722
      %v724 = vsel %vm423, %v723, 0
      %726 = vmatpush.msra.mxu0 0.0
      %727 = vmatpush.msra.mxu0 0.0
      %728 = vmatpush.msra.mxu0 0.0
      %729 = vmatpush.msra.mxu0 0.0
      %730 = vmatpush.msra.mxu0 0.0
      %731 = vmatpush.msra.mxu0 0.0
      %732 = vmatpush.msra.mxu0 0.0
      %733 = vmatpush.msra.mxu0 0.0
      %734 = vmatpush.msra.mxu0 0.0
      %735 = vmatpush.msra.mxu0 0.0
      %736 = vmatpush.msra.mxu0 0.0
      %737 = vmatpush.msra.mxu0 0.0
      %738 = vmatpush.msra.mxu0 %v417
      %739 = vmatpush.msra.mxu0 %v416
      %740 = vmatpush.msra.mxu0 %v415
      %741 = vmatpush.msra.mxu0 %v414
      %742 = vmatmul.f32.gmra.mxu0 %v724
      %v743 = vpop.f32.mrf.mxu0
      %v744 = vadd.f32 %v420, %v743
      %745 = vdwg.mxu0
      %747 = vrot.lane.b32.xlu0 %v744, 32
      %v748 = vpop.permute.xlu0 %747
      %vm750 = vcmask 517376
      %751 = vst.msk [vmem:[%s393] sm:$0x3] %vm750, %v748
      %s752 = scalar_lea.vmem %s367, 4
      %v753 = vld [vmem:[%s752] sm:$0x3]
      %v755 = vsel %vm423, %v753, 0
      %757 = vmatpush.msra.mxu0 0.0
      %758 = vmatpush.msra.mxu0 0.0
      %759 = vmatpush.msra.mxu0 0.0
      %760 = vmatpush.msra.mxu0 0.0
      %761 = vmatpush.msra.mxu0 0.0
      %762 = vmatpush.msra.mxu0 0.0
      %763 = vmatpush.msra.mxu0 0.0
      %764 = vmatpush.msra.mxu0 0.0
      %765 = vmatpush.msra.mxu0 0.0
      %766 = vmatpush.msra.mxu0 0.0
      %767 = vmatpush.msra.mxu0 0.0
      %768 = vmatpush.msra.mxu0 0.0
      %769 = vmatpush.msra.mxu0 %v401
      %770 = vmatpush.msra.mxu0 %v400
      %771 = vmatpush.msra.mxu0 %v399
      %772 = vmatpush.msra.mxu0 %v398
      %773 = vmatmul.f32.gmra.mxu0 %v755
      %v774 = vpop.f32.mrf.mxu0
      %v775 = vadd.f32 0.0, %v774
      %776 = vdwg.mxu0
      %v777 = vsel %vm423, %v744, 0
      %779 = vmatpush.msra.mxu0 0.0
      %780 = vmatpush.msra.mxu0 0.0
      %781 = vmatpush.msra.mxu0 0.0
      %782 = vmatpush.msra.mxu0 0.0
      %783 = vmatpush.msra.mxu0 0.0
      %784 = vmatpush.msra.mxu0 0.0
      %785 = vmatpush.msra.mxu0 0.0
      %786 = vmatpush.msra.mxu0 0.0
      %787 = vmatpush.msra.mxu0 0.0
      %788 = vmatpush.msra.mxu0 0.0
      %789 = vmatpush.msra.mxu0 0.0
      %790 = vmatpush.msra.mxu0 0.0
      %791 = vmatpush.msra.mxu0 %v397
      %792 = vmatpush.msra.mxu0 %v396
      %793 = vmatpush.msra.mxu0 %v395
      %794 = vmatpush.msra.mxu0 %v394
      %795 = vmatmul.f32.gmra.mxu0 %v777
      %v796 = vpop.f32.mrf.mxu0
      %v797 = vadd.f32 %v775, %v796
      %798 = vdwg.mxu0
      %v799 = vadd.f32 %v797, %v404
      %v800 = vxor.u32 %v799, 2147483648
      %v801 = vmul.f32 %v800, 1.442695
      %v802 = vpow.pop %v801
      %v803 = vadd.f32 %v802, 1.0
      %v804 = vrcp.pop %v803
      %v805 = vmul.f32 %v803, %v804
      %v806 = vsub.f32 1.0, %v805
      %v807 = vmul.f32 %v804, %v806
      %v808 = vadd.f32 %v804, %v807
      %vm809 = vweird.f32 %v803
      %vm810 = vweird.f32 %v804
      %vm811 = vmor %vm809, %vm810
      %v812 = vsel %vm811, %v804, %v808
      %v813 = vand.u32 2147483647, %v803
      %vm814 = vcmp.eq.f32.partialorder %v813, 8.507059e+37
      %v815 = vand.u32 %v803, 2147483648
      %v816 = vor.u32 1.1754944e-38, %v815
      %v817 = vsel %vm814, %v816, %v812
      %v818 = vmul.f32 1.0, %v817
      %v819 = vtanh.pop %v799
      %821 = vrot.lane.b32.xlu0 %v819, 96
      %v822 = vpop.permute.xlu0 %821
      %v824 = vmul.f32 %v818, %v822
      %v825 = vtanh.pop %v824
      %827 = vrot.lane.b32.xlu0 %v825, 64
      %v828 = vpop.permute.xlu0 %827
      %v830 = vmul.f32 %v818, %v828
      %832 = vrot.lane.b32.xlu0 %v830, 64
      %v833 = vpop.permute.xlu0 %832
      %v834 = vsel %vm423, %v833, 0
      %836 = vmatpush.msra.mxu0 0.0
      %837 = vmatpush.msra.mxu0 0.0
      %838 = vmatpush.msra.mxu0 0.0
      %839 = vmatpush.msra.mxu0 0.0
      %840 = vmatpush.msra.mxu0 0.0
      %841 = vmatpush.msra.mxu0 0.0
      %842 = vmatpush.msra.mxu0 0.0
      %843 = vmatpush.msra.mxu0 0.0
      %844 = vmatpush.msra.mxu0 0.0
      %845 = vmatpush.msra.mxu0 0.0
      %846 = vmatpush.msra.mxu0 0.0
      %847 = vmatpush.msra.mxu0 0.0
      %848 = vmatpush.msra.mxu0 %v409
      %849 = vmatpush.msra.mxu0 %v408
      %850 = vmatpush.msra.mxu0 %v407
      %851 = vmatpush.msra.mxu0 %v406
      %852 = vmatmul.f32.gmra.mxu0 %v834
      %v853 = vpop.f32.mrf.mxu0
      %v854 = vadd.f32 %v412, %v853
      %855 = vdwg.mxu0
      %v856 = vxor.u32 %v854, 2147483648
      %v857 = vmul.f32 %v856, 1.442695
      %v858 = vpow.pop %v857
      %v859 = vadd.f32 %v858, 1.0
      %v860 = vrcp.pop %v859
      %v861 = vmul.f32 %v859, %v860
      %v862 = vsub.f32 1.0, %v861
      %v863 = vmul.f32 %v860, %v862
      %v864 = vadd.f32 %v860, %v863
      %vm865 = vweird.f32 %v859
      %vm866 = vweird.f32 %v860
      %vm867 = vmor %vm865, %vm866
      %v868 = vsel %vm867, %v860, %v864
      %v869 = vand.u32 2147483647, %v859
      %vm870 = vcmp.eq.f32.partialorder %v869, 8.507059e+37
      %v871 = vand.u32 %v859, 2147483648
      %v872 = vor.u32 1.1754944e-38, %v871
      %v873 = vsel %vm870, %v872, %v868
      %v874 = vmul.f32 1.0, %v873
      %v875 = vtanh.pop %v854
      %877 = vrot.lane.b32.xlu0 %v875, 96
      %v878 = vpop.permute.xlu0 %877
      %v880 = vmul.f32 %v874, %v878
      %v881 = vtanh.pop %v880
      %883 = vrot.lane.b32.xlu0 %v881, 64
      %v884 = vpop.permute.xlu0 %883
      %v886 = vmul.f32 %v874, %v884
      %888 = vrot.lane.b32.xlu0 %v886, 64
      %v889 = vpop.permute.xlu0 %888
      %v890 = vsel %vm423, %v889, 0
      %892 = vmatpush.msra.mxu0 0.0
      %893 = vmatpush.msra.mxu0 0.0
      %894 = vmatpush.msra.mxu0 0.0
      %895 = vmatpush.msra.mxu0 0.0
      %896 = vmatpush.msra.mxu0 0.0
      %897 = vmatpush.msra.mxu0 0.0
      %898 = vmatpush.msra.mxu0 0.0
      %899 = vmatpush.msra.mxu0 0.0
      %900 = vmatpush.msra.mxu0 0.0
      %901 = vmatpush.msra.mxu0 0.0
      %902 = vmatpush.msra.mxu0 0.0
      %903 = vmatpush.msra.mxu0 0.0
      %904 = vmatpush.msra.mxu0 %v417
      %905 = vmatpush.msra.mxu0 %v416
      %906 = vmatpush.msra.mxu0 %v415
      %907 = vmatpush.msra.mxu0 %v414
      %908 = vmatmul.f32.gmra.mxu0 %v890
      %v909 = vpop.f32.mrf.mxu0
      %v910 = vadd.f32 %v420, %v909
      %911 = vdwg.mxu0
      %913 = vrot.lane.b32.xlu0 %v910, 64
      %v914 = vpop.permute.xlu0 %913
      %vm916 = vcmask 779776
      %917 = vst.msk [vmem:[%s393] sm:$0x3] %vm916, %v914
      %s918 = scalar_lea.vmem %s367, 6
      %v919 = vld [vmem:[%s918] sm:$0x3]
      %v921 = vsel %vm423, %v919, 0
      %923 = vmatpush.msra.mxu0 0.0
      %924 = vmatpush.msra.mxu0 0.0
      %925 = vmatpush.msra.mxu0 0.0
      %926 = vmatpush.msra.mxu0 0.0
      %927 = vmatpush.msra.mxu0 0.0
      %928 = vmatpush.msra.mxu0 0.0
      %929 = vmatpush.msra.mxu0 0.0
      %930 = vmatpush.msra.mxu0 0.0
      %931 = vmatpush.msra.mxu0 0.0
      %932 = vmatpush.msra.mxu0 0.0
      %933 = vmatpush.msra.mxu0 0.0
      %934 = vmatpush.msra.mxu0 0.0
      %935 = vmatpush.msra.mxu0 %v401
      %936 = vmatpush.msra.mxu0 %v400
      %937 = vmatpush.msra.mxu0 %v399
      %938 = vmatpush.msra.mxu0 %v398
      %939 = vmatmul.f32.gmra.mxu0 %v921
      %v940 = vpop.f32.mrf.mxu0
      %v941 = vadd.f32 0.0, %v940
      %942 = vdwg.mxu0
      %v943 = vsel %vm423, %v910, 0
      %945 = vmatpush.msra.mxu0 0.0
      %946 = vmatpush.msra.mxu0 0.0
      %947 = vmatpush.msra.mxu0 0.0
      %948 = vmatpush.msra.mxu0 0.0
      %949 = vmatpush.msra.mxu0 0.0
      %950 = vmatpush.msra.mxu0 0.0
      %951 = vmatpush.msra.mxu0 0.0
      %952 = vmatpush.msra.mxu0 0.0
      %953 = vmatpush.msra.mxu0 0.0
      %954 = vmatpush.msra.mxu0 0.0
      %955 = vmatpush.msra.mxu0 0.0
      %956 = vmatpush.msra.mxu0 0.0
      %957 = vmatpush.msra.mxu0 %v397
      %958 = vmatpush.msra.mxu0 %v396
      %959 = vmatpush.msra.mxu0 %v395
      %960 = vmatpush.msra.mxu0 %v394
      %961 = vmatmul.f32.gmra.mxu0 %v943
      %v962 = vpop.f32.mrf.mxu0
      %v963 = vadd.f32 %v941, %v962
      %964 = vdwg.mxu0
      %v965 = vadd.f32 %v963, %v404
      %v966 = vxor.u32 %v965, 2147483648
      %v967 = vmul.f32 %v966, 1.442695
      %v968 = vpow.pop %v967
      %v969 = vadd.f32 %v968, 1.0
      %v970 = vrcp.pop %v969
      %v971 = vmul.f32 %v969, %v970
      %v972 = vsub.f32 1.0, %v971
      %v973 = vmul.f32 %v970, %v972
      %v974 = vadd.f32 %v970, %v973
      %vm975 = vweird.f32 %v969
      %vm976 = vweird.f32 %v970
      %vm977 = vmor %vm975, %vm976
      %v978 = vsel %vm977, %v970, %v974
      %v979 = vand.u32 2147483647, %v969
      %vm980 = vcmp.eq.f32.partialorder %v979, 8.507059e+37
      %v981 = vand.u32 %v969, 2147483648
      %v982 = vor.u32 1.1754944e-38, %v981
      %v983 = vsel %vm980, %v982, %v978
      %v984 = vmul.f32 1.0, %v983
      %v985 = vtanh.pop %v965
      %987 = vrot.lane.b32.xlu0 %v985, 96
      %v988 = vpop.permute.xlu0 %987
      %v990 = vmul.f32 %v984, %v988
      %v991 = vtanh.pop %v990
      %993 = vrot.lane.b32.xlu0 %v991, 64
      %v994 = vpop.permute.xlu0 %993
      %v996 = vmul.f32 %v984, %v994
      %998 = vrot.lane.b32.xlu0 %v996, 64
      %v999 = vpop.permute.xlu0 %998
      %v1000 = vsel %vm423, %v999, 0
      %1002 = vmatpush.msra.mxu0 0.0
      %1003 = vmatpush.msra.mxu0 0.0
      %1004 = vmatpush.msra.mxu0 0.0
      %1005 = vmatpush.msra.mxu0 0.0
      %1006 = vmatpush.msra.mxu0 0.0
      %1007 = vmatpush.msra.mxu0 0.0
      %1008 = vmatpush.msra.mxu0 0.0
      %1009 = vmatpush.msra.mxu0 0.0
      %1010 = vmatpush.msra.mxu0 0.0
      %1011 = vmatpush.msra.mxu0 0.0
      %1012 = vmatpush.msra.mxu0 0.0
      %1013 = vmatpush.msra.mxu0 0.0
      %1014 = vmatpush.msra.mxu0 %v409
      %1015 = vmatpush.msra.mxu0 %v408
      %1016 = vmatpush.msra.mxu0 %v407
      %1017 = vmatpush.msra.mxu0 %v406
      %1018 = vmatmul.f32.gmra.mxu0 %v1000
      %v1019 = vpop.f32.mrf.mxu0
      %v1020 = vadd.f32 %v412, %v1019
      %1021 = vdwg.mxu0
      %v1022 = vxor.u32 %v1020, 2147483648
      %v1023 = vmul.f32 %v1022, 1.442695
      %v1024 = vpow.pop %v1023
      %v1025 = vadd.f32 %v1024, 1.0
      %v1026 = vrcp.pop %v1025
      %v1027 = vmul.f32 %v1025, %v1026
      %v1028 = vsub.f32 1.0, %v1027
      %v1029 = vmul.f32 %v1026, %v1028
      %v1030 = vadd.f32 %v1026, %v1029
      %vm1031 = vweird.f32 %v1025
      %vm1032 = vweird.f32 %v1026
      %vm1033 = vmor %vm1031, %vm1032
      %v1034 = vsel %vm1033, %v1026, %v1030
      %v1035 = vand.u32 2147483647, %v1025
      %vm1036 = vcmp.eq.f32.partialorder %v1035, 8.507059e+37
      %v1037 = vand.u32 %v1025, 2147483648
      %v1038 = vor.u32 1.1754944e-38, %v1037
      %v1039 = vsel %vm1036, %v1038, %v1034
      %v1040 = vmul.f32 1.0, %v1039
      %v1041 = vtanh.pop %v1020
      %1043 = vrot.lane.b32.xlu0 %v1041, 96
      %v1044 = vpop.permute.xlu0 %1043
      %v1046 = vmul.f32 %v1040, %v1044
      %v1047 = vtanh.pop %v1046
      %1049 = vrot.lane.b32.xlu0 %v1047, 64
      %v1050 = vpop.permute.xlu0 %1049
      %v1052 = vmul.f32 %v1040, %v1050
      %1054 = vrot.lane.b32.xlu0 %v1052, 64
      %v1055 = vpop.permute.xlu0 %1054
      %v1056 = vsel %vm423, %v1055, 0
      %1058 = vmatpush.msra.mxu0 0.0
      %1059 = vmatpush.msra.mxu0 0.0
      %1060 = vmatpush.msra.mxu0 0.0
      %1061 = vmatpush.msra.mxu0 0.0
      %1062 = vmatpush.msra.mxu0 0.0
      %1063 = vmatpush.msra.mxu0 0.0
      %1064 = vmatpush.msra.mxu0 0.0
      %1065 = vmatpush.msra.mxu0 0.0
      %1066 = vmatpush.msra.mxu0 0.0
      %1067 = vmatpush.msra.mxu0 0.0
      %1068 = vmatpush.msra.mxu0 0.0
      %1069 = vmatpush.msra.mxu0 0.0
      %1070 = vmatpush.msra.mxu0 %v417
      %1071 = vmatpush.msra.mxu0 %v416
      %1072 = vmatpush.msra.mxu0 %v415
      %1073 = vmatpush.msra.mxu0 %v414
      %1074 = vmatmul.f32.gmra.mxu0 %v1056
      %v1075 = vpop.f32.mrf.mxu0
      %v1076 = vadd.f32 %v420, %v1075
      %1077 = vdwg.mxu0
      %1079 = vrot.lane.b32.xlu0 %v1076, 96
      %v1080 = vpop.permute.xlu0 %1079
      %vm1082 = vcmask 1042176
      %1083 = vst.msk [vmem:[%s393] sm:$0x3] %vm1082, %v1080
      %s1084 = scalar_lea.vmem %s367, 8
      %v1085 = vld [vmem:[%s1084] sm:$0x3]
      %v1087 = vsel %vm423, %v1085, 0
      %1089 = vmatpush.msra.mxu0 0.0
      %1090 = vmatpush.msra.mxu0 0.0
      %1091 = vmatpush.msra.mxu0 0.0
      %1092 = vmatpush.msra.mxu0 0.0
      %1093 = vmatpush.msra.mxu0 0.0
      %1094 = vmatpush.msra.mxu0 0.0
      %1095 = vmatpush.msra.mxu0 0.0
      %1096 = vmatpush.msra.mxu0 0.0
      %1097 = vmatpush.msra.mxu0 0.0
      %1098 = vmatpush.msra.mxu0 0.0
      %1099 = vmatpush.msra.mxu0 0.0
      %1100 = vmatpush.msra.mxu0 0.0
      %1101 = vmatpush.msra.mxu0 %v401
      %1102 = vmatpush.msra.mxu0 %v400
      %1103 = vmatpush.msra.mxu0 %v399
      %1104 = vmatpush.msra.mxu0 %v398
      %1105 = vmatmul.f32.gmra.mxu0 %v1087
      %v1106 = vpop.f32.mrf.mxu0
      %v1107 = vadd.f32 0.0, %v1106
      %1108 = vdwg.mxu0
      %v1109 = vsel %vm423, %v1076, 0
      %1111 = vmatpush.msra.mxu0 0.0
      %1112 = vmatpush.msra.mxu0 0.0
      %1113 = vmatpush.msra.mxu0 0.0
      %1114 = vmatpush.msra.mxu0 0.0
      %1115 = vmatpush.msra.mxu0 0.0
      %1116 = vmatpush.msra.mxu0 0.0
      %1117 = vmatpush.msra.mxu0 0.0
      %1118 = vmatpush.msra.mxu0 0.0
      %1119 = vmatpush.msra.mxu0 0.0
      %1120 = vmatpush.msra.mxu0 0.0
      %1121 = vmatpush.msra.mxu0 0.0
      %1122 = vmatpush.msra.mxu0 0.0
      %1123 = vmatpush.msra.mxu0 %v397
      %1124 = vmatpush.msra.mxu0 %v396
      %1125 = vmatpush.msra.mxu0 %v395
      %1126 = vmatpush.msra.mxu0 %v394
      %1127 = vmatmul.f32.gmra.mxu0 %v1109
      %v1128 = vpop.f32.mrf.mxu0
      %v1129 = vadd.f32 %v1107, %v1128
      %1130 = vdwg.mxu0
      %v1131 = vadd.f32 %v1129, %v404
      %v1132 = vxor.u32 %v1131, 2147483648
      %v1133 = vmul.f32 %v1132, 1.442695
      %v1134 = vpow.pop %v1133
      %v1135 = vadd.f32 %v1134, 1.0
      %v1136 = vrcp.pop %v1135
      %v1137 = vmul.f32 %v1135, %v1136
      %v1138 = vsub.f32 1.0, %v1137
      %v1139 = vmul.f32 %v1136, %v1138
      %v1140 = vadd.f32 %v1136, %v1139
      %vm1141 = vweird.f32 %v1135
      %vm1142 = vweird.f32 %v1136
      %vm1143 = vmor %vm1141, %vm1142
      %v1144 = vsel %vm1143, %v1136, %v1140
      %v1145 = vand.u32 2147483647, %v1135
      %vm1146 = vcmp.eq.f32.partialorder %v1145, 8.507059e+37
      %v1147 = vand.u32 %v1135, 2147483648
      %v1148 = vor.u32 1.1754944e-38, %v1147
      %v1149 = vsel %vm1146, %v1148, %v1144
      %v1150 = vmul.f32 1.0, %v1149
      %v1151 = vtanh.pop %v1131
      %1153 = vrot.lane.b32.xlu0 %v1151, 96
      %v1154 = vpop.permute.xlu0 %1153
      %v1156 = vmul.f32 %v1150, %v1154
      %v1157 = vtanh.pop %v1156
      %1159 = vrot.lane.b32.xlu0 %v1157, 64
      %v1160 = vpop.permute.xlu0 %1159
      %v1162 = vmul.f32 %v1150, %v1160
      %1164 = vrot.lane.b32.xlu0 %v1162, 64
      %v1165 = vpop.permute.xlu0 %1164
      %v1166 = vsel %vm423, %v1165, 0
      %1168 = vmatpush.msra.mxu0 0.0
      %1169 = vmatpush.msra.mxu0 0.0
      %1170 = vmatpush.msra.mxu0 0.0
      %1171 = vmatpush.msra.mxu0 0.0
      %1172 = vmatpush.msra.mxu0 0.0
      %1173 = vmatpush.msra.mxu0 0.0
      %1174 = vmatpush.msra.mxu0 0.0
      %1175 = vmatpush.msra.mxu0 0.0
      %1176 = vmatpush.msra.mxu0 0.0
      %1177 = vmatpush.msra.mxu0 0.0
      %1178 = vmatpush.msra.mxu0 0.0
      %1179 = vmatpush.msra.mxu0 0.0
      %1180 = vmatpush.msra.mxu0 %v409
      %1181 = vmatpush.msra.mxu0 %v408
      %1182 = vmatpush.msra.mxu0 %v407
      %1183 = vmatpush.msra.mxu0 %v406
      %1184 = vmatmul.f32.gmra.mxu0 %v1166
      %v1185 = vpop.f32.mrf.mxu0
      %v1186 = vadd.f32 %v412, %v1185
      %1187 = vdwg.mxu0
      %v1188 = vxor.u32 %v1186, 2147483648
      %v1189 = vmul.f32 %v1188, 1.442695
      %v1190 = vpow.pop %v1189
      %v1191 = vadd.f32 %v1190, 1.0
      %v1192 = vrcp.pop %v1191
      %v1193 = vmul.f32 %v1191, %v1192
      %v1194 = vsub.f32 1.0, %v1193
      %v1195 = vmul.f32 %v1192, %v1194
      %v1196 = vadd.f32 %v1192, %v1195
      %vm1197 = vweird.f32 %v1191
      %vm1198 = vweird.f32 %v1192
      %vm1199 = vmor %vm1197, %vm1198
      %v1200 = vsel %vm1199, %v1192, %v1196
      %v1201 = vand.u32 2147483647, %v1191
      %vm1202 = vcmp.eq.f32.partialorder %v1201, 8.507059e+37
      %v1203 = vand.u32 %v1191, 2147483648
      %v1204 = vor.u32 1.1754944e-38, %v1203
      %v1205 = vsel %vm1202, %v1204, %v1200
      %v1206 = vmul.f32 1.0, %v1205
      %v1207 = vtanh.pop %v1186
      %1209 = vrot.lane.b32.xlu0 %v1207, 96
      %v1210 = vpop.permute.xlu0 %1209
      %v1212 = vmul.f32 %v1206, %v1210
      %v1213 = vtanh.pop %v1212
      %1215 = vrot.lane.b32.xlu0 %v1213, 64
      %v1216 = vpop.permute.xlu0 %1215
      %v1218 = vmul.f32 %v1206, %v1216
      %1220 = vrot.lane.b32.xlu0 %v1218, 64
      %v1221 = vpop.permute.xlu0 %1220
      %v1222 = vsel %vm423, %v1221, 0
      %1224 = vmatpush.msra.mxu0 0.0
      %1225 = vmatpush.msra.mxu0 0.0
      %1226 = vmatpush.msra.mxu0 0.0
      %1227 = vmatpush.msra.mxu0 0.0
      %1228 = vmatpush.msra.mxu0 0.0
      %1229 = vmatpush.msra.mxu0 0.0
      %1230 = vmatpush.msra.mxu0 0.0
      %1231 = vmatpush.msra.mxu0 0.0
      %1232 = vmatpush.msra.mxu0 0.0
      %1233 = vmatpush.msra.mxu0 0.0
      %1234 = vmatpush.msra.mxu0 0.0
      %1235 = vmatpush.msra.mxu0 0.0
      %1236 = vmatpush.msra.mxu0 %v417
      %1237 = vmatpush.msra.mxu0 %v416
      %1238 = vmatpush.msra.mxu0 %v415
      %1239 = vmatpush.msra.mxu0 %v414
      %1240 = vmatmul.f32.gmra.mxu0 %v1222
      %v1241 = vpop.f32.mrf.mxu0
      %v1242 = vadd.f32 %v420, %v1241
      %1243 = vdwg.mxu0
      %1244 = vst.msk [vmem:[%s393 + $0x2] sm:$0x3] %vm583, %v1242
      %s1245 = scalar_lea.vmem %s367, 10
      %v1246 = vld [vmem:[%s1245] sm:$0x3]
      %v1248 = vsel %vm423, %v1246, 0
      %1250 = vmatpush.msra.mxu0 0.0
      %1251 = vmatpush.msra.mxu0 0.0
      %1252 = vmatpush.msra.mxu0 0.0
      %1253 = vmatpush.msra.mxu0 0.0
      %1254 = vmatpush.msra.mxu0 0.0
      %1255 = vmatpush.msra.mxu0 0.0
      %1256 = vmatpush.msra.mxu0 0.0
      %1257 = vmatpush.msra.mxu0 0.0
      %1258 = vmatpush.msra.mxu0 0.0
      %1259 = vmatpush.msra.mxu0 0.0
      %1260 = vmatpush.msra.mxu0 0.0
      %1261 = vmatpush.msra.mxu0 0.0
      %1262 = vmatpush.msra.mxu0 %v401
      %1263 = vmatpush.msra.mxu0 %v400
      %1264 = vmatpush.msra.mxu0 %v399
      %1265 = vmatpush.msra.mxu0 %v398
      %1266 = vmatmul.f32.gmra.mxu0 %v1248
      %v1267 = vpop.f32.mrf.mxu0
      %v1268 = vadd.f32 0.0, %v1267
      %1269 = vdwg.mxu0
      %v1271 = vsel %vm423, %v1242, 0
      %1273 = vmatpush.msra.mxu0 0.0
      %1274 = vmatpush.msra.mxu0 0.0
      %1275 = vmatpush.msra.mxu0 0.0
      %1276 = vmatpush.msra.mxu0 0.0
      %1277 = vmatpush.msra.mxu0 0.0
      %1278 = vmatpush.msra.mxu0 0.0
      %1279 = vmatpush.msra.mxu0 0.0
      %1280 = vmatpush.msra.mxu0 0.0
      %1281 = vmatpush.msra.mxu0 0.0
      %1282 = vmatpush.msra.mxu0 0.0
      %1283 = vmatpush.msra.mxu0 0.0
      %1284 = vmatpush.msra.mxu0 0.0
      %1285 = vmatpush.msra.mxu0 %v397
      %1286 = vmatpush.msra.mxu0 %v396
      %1287 = vmatpush.msra.mxu0 %v395
      %1288 = vmatpush.msra.mxu0 %v394
      %1289 = vmatmul.f32.gmra.mxu0 %v1271
      %v1290 = vpop.f32.mrf.mxu0
      %v1291 = vadd.f32 %v1268, %v1290
      %1292 = vdwg.mxu0
      %v1293 = vadd.f32 %v1291, %v404
      %v1294 = vxor.u32 %v1293, 2147483648
      %v1295 = vmul.f32 %v1294, 1.442695
      %v1296 = vpow.pop %v1295
      %v1297 = vadd.f32 %v1296, 1.0
      %v1298 = vrcp.pop %v1297
      %v1299 = vmul.f32 %v1297, %v1298
      %v1300 = vsub.f32 1.0, %v1299
      %v1301 = vmul.f32 %v1298, %v1300
      %v1302 = vadd.f32 %v1298, %v1301
      %vm1303 = vweird.f32 %v1297
      %vm1304 = vweird.f32 %v1298
      %vm1305 = vmor %vm1303, %vm1304
      %v1306 = vsel %vm1305, %v1298, %v1302
      %v1307 = vand.u32 2147483647, %v1297
      %vm1308 = vcmp.eq.f32.partialorder %v1307, 8.507059e+37
      %v1309 = vand.u32 %v1297, 2147483648
      %v1310 = vor.u32 1.1754944e-38, %v1309
      %v1311 = vsel %vm1308, %v1310, %v1306
      %v1312 = vmul.f32 1.0, %v1311
      %v1313 = vtanh.pop %v1293
      %1315 = vrot.lane.b32.xlu0 %v1313, 96
      %v1316 = vpop.permute.xlu0 %1315
      %v1318 = vmul.f32 %v1312, %v1316
      %v1319 = vtanh.pop %v1318
      %1321 = vrot.lane.b32.xlu0 %v1319, 64
      %v1322 = vpop.permute.xlu0 %1321
      %v1324 = vmul.f32 %v1312, %v1322
      %1326 = vrot.lane.b32.xlu0 %v1324, 64
      %v1327 = vpop.permute.xlu0 %1326
      %v1328 = vsel %vm423, %v1327, 0
      %1330 = vmatpush.msra.mxu0 0.0
      %1331 = vmatpush.msra.mxu0 0.0
      %1332 = vmatpush.msra.mxu0 0.0
      %1333 = vmatpush.msra.mxu0 0.0
      %1334 = vmatpush.msra.mxu0 0.0
      %1335 = vmatpush.msra.mxu0 0.0
      %1336 = vmatpush.msra.mxu0 0.0
      %1337 = vmatpush.msra.mxu0 0.0
      %1338 = vmatpush.msra.mxu0 0.0
      %1339 = vmatpush.msra.mxu0 0.0
      %1340 = vmatpush.msra.mxu0 0.0
      %1341 = vmatpush.msra.mxu0 0.0
      %1342 = vmatpush.msra.mxu0 %v409
      %1343 = vmatpush.msra.mxu0 %v408
      %1344 = vmatpush.msra.mxu0 %v407
      %1345 = vmatpush.msra.mxu0 %v406
      %1346 = vmatmul.f32.gmra.mxu0 %v1328
      %v1347 = vpop.f32.mrf.mxu0
      %v1348 = vadd.f32 %v412, %v1347
      %1349 = vdwg.mxu0
      %v1350 = vxor.u32 %v1348, 2147483648
      %v1351 = vmul.f32 %v1350, 1.442695
      %v1352 = vpow.pop %v1351
      %v1353 = vadd.f32 %v1352, 1.0
      %v1354 = vrcp.pop %v1353
      %v1355 = vmul.f32 %v1353, %v1354
      %v1356 = vsub.f32 1.0, %v1355
      %v1357 = vmul.f32 %v1354, %v1356
      %v1358 = vadd.f32 %v1354, %v1357
      %vm1359 = vweird.f32 %v1353
      %vm1360 = vweird.f32 %v1354
      %vm1361 = vmor %vm1359, %vm1360
      %v1362 = vsel %vm1361, %v1354, %v1358
      %v1363 = vand.u32 2147483647, %v1353
      %vm1364 = vcmp.eq.f32.partialorder %v1363, 8.507059e+37
      %v1365 = vand.u32 %v1353, 2147483648
      %v1366 = vor.u32 1.1754944e-38, %v1365
      %v1367 = vsel %vm1364, %v1366, %v1362
      %v1368 = vmul.f32 1.0, %v1367
      %v1369 = vtanh.pop %v1348
      %1371 = vrot.lane.b32.xlu0 %v1369, 96
      %v1372 = vpop.permute.xlu0 %1371
      %v1374 = vmul.f32 %v1368, %v1372
      %v1375 = vtanh.pop %v1374
      %1377 = vrot.lane.b32.xlu0 %v1375, 64
      %v1378 = vpop.permute.xlu0 %1377
      %v1380 = vmul.f32 %v1368, %v1378
      %1382 = vrot.lane.b32.xlu0 %v1380, 64
      %v1383 = vpop.permute.xlu0 %1382
      %v1384 = vsel %vm423, %v1383, 0
      %1386 = vmatpush.msra.mxu0 0.0
      %1387 = vmatpush.msra.mxu0 0.0
      %1388 = vmatpush.msra.mxu0 0.0
      %1389 = vmatpush.msra.mxu0 0.0
      %1390 = vmatpush.msra.mxu0 0.0
      %1391 = vmatpush.msra.mxu0 0.0
      %1392 = vmatpush.msra.mxu0 0.0
      %1393 = vmatpush.msra.mxu0 0.0
      %1394 = vmatpush.msra.mxu0 0.0
      %1395 = vmatpush.msra.mxu0 0.0
      %1396 = vmatpush.msra.mxu0 0.0
      %1397 = vmatpush.msra.mxu0 0.0
      %1398 = vmatpush.msra.mxu0 %v417
      %1399 = vmatpush.msra.mxu0 %v416
      %1400 = vmatpush.msra.mxu0 %v415
      %1401 = vmatpush.msra.mxu0 %v414
      %1402 = vmatmul.f32.gmra.mxu0 %v1384
      %v1403 = vpop.f32.mrf.mxu0
      %v1404 = vadd.f32 %v420, %v1403
      %1405 = vdwg.mxu0
      %1407 = vrot.lane.b32.xlu0 %v1404, 32
      %v1408 = vpop.permute.xlu0 %1407
      %1410 = vst.msk [vmem:[%s393 + $0x2] sm:$0x3] %vm750, %v1408
      %s1411 = scalar_lea.vmem %s367, 12
      %v1412 = vld [vmem:[%s1411] sm:$0x3]
      %v1414 = vsel %vm423, %v1412, 0
      %1416 = vmatpush.msra.mxu0 0.0
      %1417 = vmatpush.msra.mxu0 0.0
      %1418 = vmatpush.msra.mxu0 0.0
      %1419 = vmatpush.msra.mxu0 0.0
      %1420 = vmatpush.msra.mxu0 0.0
      %1421 = vmatpush.msra.mxu0 0.0
      %1422 = vmatpush.msra.mxu0 0.0
      %1423 = vmatpush.msra.mxu0 0.0
      %1424 = vmatpush.msra.mxu0 0.0
      %1425 = vmatpush.msra.mxu0 0.0
      %1426 = vmatpush.msra.mxu0 0.0
      %1427 = vmatpush.msra.mxu0 0.0
      %1428 = vmatpush.msra.mxu0 %v401
      %1429 = vmatpush.msra.mxu0 %v400
      %1430 = vmatpush.msra.mxu0 %v399
      %1431 = vmatpush.msra.mxu0 %v398
      %1432 = vmatmul.f32.gmra.mxu0 %v1414
      %v1433 = vpop.f32.mrf.mxu0
      %v1434 = vadd.f32 0.0, %v1433
      %1435 = vdwg.mxu0
      %v1436 = vsel %vm423, %v1404, 0
      %1438 = vmatpush.msra.mxu0 0.0
      %1439 = vmatpush.msra.mxu0 0.0
      %1440 = vmatpush.msra.mxu0 0.0
      %1441 = vmatpush.msra.mxu0 0.0
      %1442 = vmatpush.msra.mxu0 0.0
      %1443 = vmatpush.msra.mxu0 0.0
      %1444 = vmatpush.msra.mxu0 0.0
      %1445 = vmatpush.msra.mxu0 0.0
      %1446 = vmatpush.msra.mxu0 0.0
      %1447 = vmatpush.msra.mxu0 0.0
      %1448 = vmatpush.msra.mxu0 0.0
      %1449 = vmatpush.msra.mxu0 0.0
      %1450 = vmatpush.msra.mxu0 %v397
      %1451 = vmatpush.msra.mxu0 %v396
      %1452 = vmatpush.msra.mxu0 %v395
      %1453 = vmatpush.msra.mxu0 %v394
      %1454 = vmatmul.f32.gmra.mxu0 %v1436
      %v1455 = vpop.f32.mrf.mxu0
      %v1456 = vadd.f32 %v1434, %v1455
      %1457 = vdwg.mxu0
      %v1458 = vadd.f32 %v1456, %v404
      %v1459 = vxor.u32 %v1458, 2147483648
      %v1460 = vmul.f32 %v1459, 1.442695
      %v1461 = vpow.pop %v1460
      %v1462 = vadd.f32 %v1461, 1.0
      %v1463 = vrcp.pop %v1462
      %v1464 = vmul.f32 %v1462, %v1463
      %v1465 = vsub.f32 1.0, %v1464
      %v1466 = vmul.f32 %v1463, %v1465
      %v1467 = vadd.f32 %v1463, %v1466
      %vm1468 = vweird.f32 %v1462
      %vm1469 = vweird.f32 %v1463
      %vm1470 = vmor %vm1468, %vm1469
      %v1471 = vsel %vm1470, %v1463, %v1467
      %v1472 = vand.u32 2147483647, %v1462
      %vm1473 = vcmp.eq.f32.partialorder %v1472, 8.507059e+37
      %v1474 = vand.u32 %v1462, 2147483648
      %v1475 = vor.u32 1.1754944e-38, %v1474
      %v1476 = vsel %vm1473, %v1475, %v1471
      %v1477 = vmul.f32 1.0, %v1476
      %v1478 = vtanh.pop %v1458
      %1480 = vrot.lane.b32.xlu0 %v1478, 96
      %v1481 = vpop.permute.xlu0 %1480
      %v1483 = vmul.f32 %v1477, %v1481
      %v1484 = vtanh.pop %v1483
      %1486 = vrot.lane.b32.xlu0 %v1484, 64
      %v1487 = vpop.permute.xlu0 %1486
      %v1489 = vmul.f32 %v1477, %v1487
      %1491 = vrot.lane.b32.xlu0 %v1489, 64
      %v1492 = vpop.permute.xlu0 %1491
      %v1493 = vsel %vm423, %v1492, 0
      %1495 = vmatpush.msra.mxu0 0.0
      %1496 = vmatpush.msra.mxu0 0.0
      %1497 = vmatpush.msra.mxu0 0.0
      %1498 = vmatpush.msra.mxu0 0.0
      %1499 = vmatpush.msra.mxu0 0.0
      %1500 = vmatpush.msra.mxu0 0.0
      %1501 = vmatpush.msra.mxu0 0.0
      %1502 = vmatpush.msra.mxu0 0.0
      %1503 = vmatpush.msra.mxu0 0.0
      %1504 = vmatpush.msra.mxu0 0.0
      %1505 = vmatpush.msra.mxu0 0.0
      %1506 = vmatpush.msra.mxu0 0.0
      %1507 = vmatpush.msra.mxu0 %v409
      %1508 = vmatpush.msra.mxu0 %v408
      %1509 = vmatpush.msra.mxu0 %v407
      %1510 = vmatpush.msra.mxu0 %v406
      %1511 = vmatmul.f32.gmra.mxu0 %v1493
      %v1512 = vpop.f32.mrf.mxu0
      %v1513 = vadd.f32 %v412, %v1512
      %1514 = vdwg.mxu0
      %v1515 = vxor.u32 %v1513, 2147483648
      %v1516 = vmul.f32 %v1515, 1.442695
      %v1517 = vpow.pop %v1516
      %v1518 = vadd.f32 %v1517, 1.0
      %v1519 = vrcp.pop %v1518
      %v1520 = vmul.f32 %v1518, %v1519
      %v1521 = vsub.f32 1.0, %v1520
      %v1522 = vmul.f32 %v1519, %v1521
      %v1523 = vadd.f32 %v1519, %v1522
      %vm1524 = vweird.f32 %v1518
      %vm1525 = vweird.f32 %v1519
      %vm1526 = vmor %vm1524, %vm1525
      %v1527 = vsel %vm1526, %v1519, %v1523
      %v1528 = vand.u32 2147483647, %v1518
      %vm1529 = vcmp.eq.f32.partialorder %v1528, 8.507059e+37
      %v1530 = vand.u32 %v1518, 2147483648
      %v1531 = vor.u32 1.1754944e-38, %v1530
      %v1532 = vsel %vm1529, %v1531, %v1527
      %v1533 = vmul.f32 1.0, %v1532
      %v1534 = vtanh.pop %v1513
      %1536 = vrot.lane.b32.xlu0 %v1534, 96
      %v1537 = vpop.permute.xlu0 %1536
      %v1539 = vmul.f32 %v1533, %v1537
      %v1540 = vtanh.pop %v1539
      %1542 = vrot.lane.b32.xlu0 %v1540, 64
      %v1543 = vpop.permute.xlu0 %1542
      %v1545 = vmul.f32 %v1533, %v1543
      %1547 = vrot.lane.b32.xlu0 %v1545, 64
      %v1548 = vpop.permute.xlu0 %1547
      %v1549 = vsel %vm423, %v1548, 0
      %1551 = vmatpush.msra.mxu0 0.0
      %1552 = vmatpush.msra.mxu0 0.0
      %1553 = vmatpush.msra.mxu0 0.0
      %1554 = vmatpush.msra.mxu0 0.0
      %1555 = vmatpush.msra.mxu0 0.0
      %1556 = vmatpush.msra.mxu0 0.0
      %1557 = vmatpush.msra.mxu0 0.0
      %1558 = vmatpush.msra.mxu0 0.0
      %1559 = vmatpush.msra.mxu0 0.0
      %1560 = vmatpush.msra.mxu0 0.0
      %1561 = vmatpush.msra.mxu0 0.0
      %1562 = vmatpush.msra.mxu0 0.0
      %1563 = vmatpush.msra.mxu0 %v417
      %1564 = vmatpush.msra.mxu0 %v416
      %1565 = vmatpush.msra.mxu0 %v415
      %1566 = vmatpush.msra.mxu0 %v414
      %1567 = vmatmul.f32.gmra.mxu0 %v1549
      %v1568 = vpop.f32.mrf.mxu0
      %v1569 = vadd.f32 %v420, %v1568
      %1570 = vdwg.mxu0
      %1572 = vrot.lane.b32.xlu0 %v1569, 64
      %v1573 = vpop.permute.xlu0 %1572
      %1575 = vst.msk [vmem:[%s393 + $0x2] sm:$0x3] %vm916, %v1573
      %s1576 = scalar_lea.vmem %s367, 14
      %v1577 = vld [vmem:[%s1576] sm:$0x3]
      %v1579 = vsel %vm423, %v1577, 0
      %1581 = vmatpush.msra.mxu0 0.0
      %1582 = vmatpush.msra.mxu0 0.0
      %1583 = vmatpush.msra.mxu0 0.0
      %1584 = vmatpush.msra.mxu0 0.0
      %1585 = vmatpush.msra.mxu0 0.0
      %1586 = vmatpush.msra.mxu0 0.0
      %1587 = vmatpush.msra.mxu0 0.0
      %1588 = vmatpush.msra.mxu0 0.0
      %1589 = vmatpush.msra.mxu0 0.0
      %1590 = vmatpush.msra.mxu0 0.0
      %1591 = vmatpush.msra.mxu0 0.0
      %1592 = vmatpush.msra.mxu0 0.0
      %1593 = vmatpush.msra.mxu0 %v401
      %1594 = vmatpush.msra.mxu0 %v400
      %1595 = vmatpush.msra.mxu0 %v399
      %1596 = vmatpush.msra.mxu0 %v398
      %1597 = vmatmul.f32.gmra.mxu0 %v1579
      %v1598 = vpop.f32.mrf.mxu0
      %v1599 = vadd.f32 0.0, %v1598
      %1600 = vdwg.mxu0
      %v1601 = vsel %vm423, %v1569, 0
      %1603 = vmatpush.msra.mxu0 0.0
      %1604 = vmatpush.msra.mxu0 0.0
      %1605 = vmatpush.msra.mxu0 0.0
      %1606 = vmatpush.msra.mxu0 0.0
      %1607 = vmatpush.msra.mxu0 0.0
      %1608 = vmatpush.msra.mxu0 0.0
      %1609 = vmatpush.msra.mxu0 0.0
      %1610 = vmatpush.msra.mxu0 0.0
      %1611 = vmatpush.msra.mxu0 0.0
      %1612 = vmatpush.msra.mxu0 0.0
      %1613 = vmatpush.msra.mxu0 0.0
      %1614 = vmatpush.msra.mxu0 0.0
      %1615 = vmatpush.msra.mxu0 %v397
      %1616 = vmatpush.msra.mxu0 %v396
      %1617 = vmatpush.msra.mxu0 %v395
      %1618 = vmatpush.msra.mxu0 %v394
      %1619 = vmatmul.f32.gmra.mxu0 %v1601
      %v1620 = vpop.f32.mrf.mxu0
      %v1621 = vadd.f32 %v1599, %v1620
      %1622 = vdwg.mxu0
      %v1623 = vadd.f32 %v1621, %v404
      %v1624 = vxor.u32 %v1623, 2147483648
      %v1625 = vmul.f32 %v1624, 1.442695
      %v1626 = vpow.pop %v1625
      %v1627 = vadd.f32 %v1626, 1.0
      %v1628 = vrcp.pop %v1627
      %v1629 = vmul.f32 %v1627, %v1628
      %v1630 = vsub.f32 1.0, %v1629
      %v1631 = vmul.f32 %v1628, %v1630
      %v1632 = vadd.f32 %v1628, %v1631
      %vm1633 = vweird.f32 %v1627
      %vm1634 = vweird.f32 %v1628
      %vm1635 = vmor %vm1633, %vm1634
      %v1636 = vsel %vm1635, %v1628, %v1632
      %v1637 = vand.u32 2147483647, %v1627
      %vm1638 = vcmp.eq.f32.partialorder %v1637, 8.507059e+37
      %v1639 = vand.u32 %v1627, 2147483648
      %v1640 = vor.u32 1.1754944e-38, %v1639
      %v1641 = vsel %vm1638, %v1640, %v1636
      %v1642 = vmul.f32 1.0, %v1641
      %v1643 = vtanh.pop %v1623
      %1645 = vrot.lane.b32.xlu0 %v1643, 96
      %v1646 = vpop.permute.xlu0 %1645
      %v1648 = vmul.f32 %v1642, %v1646
      %v1649 = vtanh.pop %v1648
      %1651 = vrot.lane.b32.xlu0 %v1649, 64
      %v1652 = vpop.permute.xlu0 %1651
      %v1654 = vmul.f32 %v1642, %v1652
      %1656 = vrot.lane.b32.xlu0 %v1654, 64
      %v1657 = vpop.permute.xlu0 %1656
      %v1658 = vsel %vm423, %v1657, 0
      %1660 = vmatpush.msra.mxu0 0.0
      %1661 = vmatpush.msra.mxu0 0.0
      %1662 = vmatpush.msra.mxu0 0.0
      %1663 = vmatpush.msra.mxu0 0.0
      %1664 = vmatpush.msra.mxu0 0.0
      %1665 = vmatpush.msra.mxu0 0.0
      %1666 = vmatpush.msra.mxu0 0.0
      %1667 = vmatpush.msra.mxu0 0.0
      %1668 = vmatpush.msra.mxu0 0.0
      %1669 = vmatpush.msra.mxu0 0.0
      %1670 = vmatpush.msra.mxu0 0.0
      %1671 = vmatpush.msra.mxu0 0.0
      %1672 = vmatpush.msra.mxu0 %v409
      %1673 = vmatpush.msra.mxu0 %v408
      %1674 = vmatpush.msra.mxu0 %v407
      %1675 = vmatpush.msra.mxu0 %v406
      %1676 = vmatmul.f32.gmra.mxu0 %v1658
      %v1677 = vpop.f32.mrf.mxu0
      %v1678 = vadd.f32 %v412, %v1677
      %1679 = vdwg.mxu0
      %v1680 = vxor.u32 %v1678, 2147483648
      %v1681 = vmul.f32 %v1680, 1.442695
      %v1682 = vpow.pop %v1681
      %v1683 = vadd.f32 %v1682, 1.0
      %v1684 = vrcp.pop %v1683
      %v1685 = vmul.f32 %v1683, %v1684
      %v1686 = vsub.f32 1.0, %v1685
      %v1687 = vmul.f32 %v1684, %v1686
      %v1688 = vadd.f32 %v1684, %v1687
      %vm1689 = vweird.f32 %v1683
      %vm1690 = vweird.f32 %v1684
      %vm1691 = vmor %vm1689, %vm1690
      %v1692 = vsel %vm1691, %v1684, %v1688
      %v1693 = vand.u32 2147483647, %v1683
      %vm1694 = vcmp.eq.f32.partialorder %v1693, 8.507059e+37
      %v1695 = vand.u32 %v1683, 2147483648
      %v1696 = vor.u32 1.1754944e-38, %v1695
      %v1697 = vsel %vm1694, %v1696, %v1692
      %v1698 = vmul.f32 1.0, %v1697
      %v1699 = vtanh.pop %v1678
      %1701 = vrot.lane.b32.xlu0 %v1699, 96
      %v1702 = vpop.permute.xlu0 %1701
      %v1704 = vmul.f32 %v1698, %v1702
      %v1705 = vtanh.pop %v1704
      %1707 = vrot.lane.b32.xlu0 %v1705, 64
      %v1708 = vpop.permute.xlu0 %1707
      %v1710 = vmul.f32 %v1698, %v1708
      %1712 = vrot.lane.b32.xlu0 %v1710, 64
      %v1713 = vpop.permute.xlu0 %1712
      %v1714 = vsel %vm423, %v1713, 0
      %1716 = vmatpush.msra.mxu0 0.0
      %1717 = vmatpush.msra.mxu0 0.0
      %1718 = vmatpush.msra.mxu0 0.0
      %1719 = vmatpush.msra.mxu0 0.0
      %1720 = vmatpush.msra.mxu0 0.0
      %1721 = vmatpush.msra.mxu0 0.0
      %1722 = vmatpush.msra.mxu0 0.0
      %1723 = vmatpush.msra.mxu0 0.0
      %1724 = vmatpush.msra.mxu0 0.0
      %1725 = vmatpush.msra.mxu0 0.0
      %1726 = vmatpush.msra.mxu0 0.0
      %1727 = vmatpush.msra.mxu0 0.0
      %1728 = vmatpush.msra.mxu0 %v417
      %1729 = vmatpush.msra.mxu0 %v416
      %1730 = vmatpush.msra.mxu0 %v415
      %1731 = vmatpush.msra.mxu0 %v414
      %1732 = vmatmul.f32.gmra.mxu0 %v1714
      %v1733 = vpop.f32.mrf.mxu0
      %v1734 = vadd.f32 %v420, %v1733
      %1735 = vdwg.mxu0
      %1737 = vrot.lane.b32.xlu0 %v1734, 96
      %v1738 = vpop.permute.xlu0 %1737
      %1740 = vst.msk [vmem:[%s393 + $0x2] sm:$0x3] %vm1082, %v1738
      %p1741 = scmp.lt.s32.totalorder %s19, 1
      %s1742 = scalar_select %p1741, %s19, 1
      %s1743 = smul.addr %s1742, 2
      %s1744 = smul.addr %s1743, 2
      %s1745 = scalar_lea.vmem %s8, %s1744
      // Predicated region
      $region53: #{decoder_rnn_forward.1} parent=51 // pred_check
        %p1746 = pneg %p235
      $region54: #{decoder_rnn_forward.1} parent=51 // pred_check_branch
        %1748 = sbr.rel (%p1746) target = $region56
      $region55: #{decoder_rnn_forward.1} parent=51 // pred_region
        _
      $region56: #{decoder_rnn_forward.1} parent=51 // pred_fallthru
        _
    $region52: #{decoder_rnn_forward.1} parent=5 // pred_fallthru
      _
    %p1749 = scmp.le.s32.totalorder 2, %s14
    // Predicated region
    $region57: #{decoder_rnn_forward.1} parent=5 // pred_check
      %p1750 = pneg %p1749
    $region58: #{decoder_rnn_forward.1} parent=5 // pred_check_branch
      %1752 = sbr.rel (%p1750) target = $region60
    $region59: #{decoder_rnn_forward.1} parent=5 // pred_region
      %s1753 = ssub.s32 %s14, 2
      // Predicated region
      $region61: #{decoder_rnn_forward.1} parent=59 // pred_check
        %p1754 = pneg %p241
      $region62: #{decoder_rnn_forward.1} parent=59 // pred_check_branch
        %1756 = sbr.rel (%p1754) target = $region64
      $region63: #{decoder_rnn_forward.1} parent=59 // pred_region
        %p1757 = scmp.lt.s32.totalorder %s20, 1
        %s1758 = scalar_select %p1757, %s20, 1
        %s1759 = smul.addr %s1758, 2
        %s1760 = smul.addr %s1759, 2
        %s1761 = scalar_lea.vmem %s8, %s1760
      $region64: #{decoder_rnn_forward.1} parent=59 // pred_fallthru
        _
    $region60: #{decoder_rnn_forward.1} parent=5 // pred_fallthru
      _
  $region6: #{decoder_rnn_forward.1} parent=0 // loop_footer
    %s18 = sadd.s32 1, %s14
  $region7: #{decoder_rnn_forward.1} parent=0 // loop_footer_branch
    %13 = sbr.rel target = $region3
  $region8: #{decoder_rnn_forward.1} parent=0 // loop_exit
    _

</llo_original>
